<compile_context>
chip_gen: v5e
topology: v5e:2x2
jax: 0.10.0
libtpu: 0.0.40
codegen_flags: <defaults>
</compile_context>

<pallas_src>
import functools

import jax
import jax.numpy as jnp
from jax.experimental import pallas as pl
from jax.experimental.pallas import tpu as pltpu


def _round_up(x: int, m: int) -> int:
    return ((x + m - 1) // m) * m


def _vae_kernel(obs_ref, act_ref, eps_ref,
                we1o_ref, we1a_ref, be1_ref,
                we2_ref, be2_ref,
                wh_ref, bh_ref,
                wd1o_ref, wd1z_ref, bd1_ref,
                wd2_ref, bd2_ref,
                wd3_ref, bd3_ref,
                out_ref,
                *, max_action: float, lp: int, op: int):
    """One batch tile of the full VAE forward.

    All feature dims of the weight operands are pre-padded to multiples of 128
    in the wrapper, so every matmul, the head split, and all output stores
    below are lane-aligned.  lp / op = padded latent / output widths.
    """
    obs = obs_ref[...]
    act = act_ref[...]
    eps = eps_ref[...]          # (TB, lp), zero-padded past latent_dim

    # ---- encoder: relu(e1(cat([obs, action], 1))) ----
    # cat([obs, act]) @ We1 == obs @ We1_obs + act @ We1_act (pre-split).
    h = (jnp.dot(obs, we1o_ref[...], preferred_element_type=jnp.float32)
         + jnp.dot(act, we1a_ref[...], preferred_element_type=jnp.float32)
         + be1_ref[...])
    h = jnp.maximum(h, 0.0)

    # relu(e2(h))
    h = jnp.dot(h, we2_ref[...], preferred_element_type=jnp.float32) + be2_ref[...]
    h = jnp.maximum(h, 0.0)

    # fused mean / log_std heads: one matmul, split at a lane-aligned column.
    heads = jnp.dot(h, wh_ref[...], preferred_element_type=jnp.float32) + bh_ref[...]
    mean = heads[:, :lp]
    log_std = jnp.clip(heads[:, lp:], -4.0, 15.0)
    std = jnp.exp(log_std)

    # reparameterization: z = mean + std * eps
    # (padded latent columns: mean=0, eps=0 -> z=0; corresponding wd1_z rows
    #  are zero, so padding is neutral.)
    z = mean + std * eps

    # ---- decoder: relu(d1(cat([obs, z], 1))) ----
    a = (jnp.dot(obs, wd1o_ref[...], preferred_element_type=jnp.float32)
         + jnp.dot(z, wd1z_ref[...], preferred_element_type=jnp.float32)
         + bd1_ref[...])
    a = jnp.maximum(a, 0.0)

    a = jnp.dot(a, wd2_ref[...], preferred_element_type=jnp.float32) + bd2_ref[...]
    a = jnp.maximum(a, 0.0)

    u = jnp.dot(a, wd3_ref[...], preferred_element_type=jnp.float32) + bd3_ref[...]
    u = max_action * jnp.tanh(u)

    # lane-dense packed output: [ u (op cols) | mean (lp cols) | std (lp cols) ]
    # All split points are multiples of 128 -> unmasked stores.
    out_ref[:, :op] = u
    out_ref[:, op:op + lp] = mean
    out_ref[:, op + lp:] = std


def vae_forward(obs, action, eps, params, *, max_action: float, block_b=None):
    """Full VAE forward in one batch-tiled Pallas call.

    obs:    (B, input_dim)   float32
    action: (B, output_dim)  float32
    eps:    (B, latent_dim)  float32 standard-normal noise (randn_like(std))
    params: dict of weights stored (in_features, out_features), biases (1, out)
    Returns (u, mean, std) with the original (unpadded) feature widths.
    """
    B, input_dim = obs.shape
    output_dim = action.shape[1]
    latent_dim = eps.shape[1]
    hidden_dim = params["we2"].shape[0]
    f32 = jnp.float32

    # padded feature widths (lane-aligned)
    hp = _round_up(hidden_dim, 128)
    lp = _round_up(latent_dim, 128)
    op = _round_up(output_dim, 128)
    out_w = op + 2 * lp

    # batch tile: multiple of 8 sublanes; pad B up so every tile is full.
    if block_b is None:
        block_b = min(512, _round_up(B, 8))
    block_b = _round_up(block_b, 8)
    bp = _round_up(B, block_b)

    def pad2(x, rows, cols):
        x = jnp.asarray(x, f32)
        return jnp.pad(x, ((0, rows - x.shape[0]), (0, cols - x.shape[1])))

    # --- weight prep (outside the kernel; zero padding is neutral) ---
    we1 = jnp.asarray(params["we1"], f32)
    we1_obs = pad2(we1[:input_dim], input_dim, hp)
    we1_act = pad2(we1[input_dim:], output_dim, hp)
    be1 = pad2(params["be1"], 1, hp)

    we2 = pad2(params["we2"], hp, hp)
    be2 = pad2(params["be2"], 1, hp)

    # fused heads: [Wm | Wls], each padded to lp columns.
    w_heads = jnp.concatenate(
        [pad2(params["wm"], hp, lp), pad2(params["wls"], hp, lp)], axis=1)
    b_heads = jnp.concatenate(
        [pad2(params["bm"], 1, lp), pad2(params["bls"], 1, lp)], axis=1)

    wd1 = jnp.asarray(params["wd1"], f32)
    wd1_obs = pad2(wd1[:input_dim], input_dim, hp)
    wd1_z = pad2(wd1[input_dim:], lp, hp)          # zero rows for padded latent
    bd1 = pad2(params["bd1"], 1, hp)

    wd2 = pad2(params["wd2"], hp, hp)
    bd2 = pad2(params["bd2"], 1, hp)

    wd3 = pad2(params["wd3"], hp, op)
    bd3 = pad2(params["bd3"], 1, op)

    # --- activation prep ---
    obs_p = jnp.pad(jnp.asarray(obs, f32), ((0, bp - B), (0, 0)))
    act_p = jnp.pad(jnp.asarray(action, f32), ((0, bp - B), (0, 0)))
    eps_p = jnp.pad(jnp.asarray(eps, f32), ((0, bp - B), (0, lp - latent_dim)))

    grid = (bp // block_b,)

    def tile_spec(cols):
        return pl.BlockSpec((block_b, cols), lambda i: (i, 0))

    def resident_spec(arr):
        # full-array block, constant index -> DMA'd once, VMEM-resident.
        return pl.BlockSpec(arr.shape, lambda i: (0, 0))

    operands = (obs_p, act_p, eps_p,
                we1_obs, we1_act, be1,
                we2, be2,
                w_heads, b_heads,
                wd1_obs, wd1_z, bd1,
                wd2, bd2,
                wd3, bd3)

    in_specs = [tile_spec(input_dim), tile_spec(output_dim), tile_spec(lp)]
    in_specs += [resident_spec(w) for w in operands[3:]]

    kernel = functools.partial(_vae_kernel, max_action=float(max_action),
                               lp=lp, op=op)

    out = pl.pallas_call(
        kernel,
        grid=grid,
        out_shape=jax.ShapeDtypeStruct((bp, out_w), f32),
        in_specs=in_specs,
        out_specs=pl.BlockSpec((block_b, out_w), lambda i: (i, 0)),
        compiler_params=pltpu.CompilerParams(
            dimension_semantics=("parallel",)),
    )(*operands)

    u = out[:B, :output_dim]
    mean = out[:B, op:op + latent_dim]
    std = out[:B, op + lp:op + lp + latent_dim]
    return u, mean, std


def init_params(key, input_dim, output_dim, hidden_dim, latent_dim):
    """Deterministic synthetic parameters (PyTorch-Linear init, stored (in,out))."""
    def linear(k, fan_in, fan_out):
        kw, kb = jax.random.split(k)
        bound = 1.0 / jnp.sqrt(fan_in)
        w = jax.random.uniform(kw, (fan_in, fan_out), jnp.float32, -bound, bound)
        b = jax.random.uniform(kb, (1, fan_out), jnp.float32, -bound, bound)
        return w, b

    keys = jax.random.split(key, 7)
    p = {}
    p["we1"], p["be1"] = linear(keys[0], input_dim + output_dim, hidden_dim)
    p["we2"], p["be2"] = linear(keys[1], hidden_dim, hidden_dim)
    p["wm"], p["bm"] = linear(keys[2], hidden_dim, latent_dim)
    p["wls"], p["bls"] = linear(keys[3], hidden_dim, latent_dim)
    p["wd1"], p["bd1"] = linear(keys[4], input_dim + latent_dim, hidden_dim)
    p["wd2"], p["bd2"] = linear(keys[5], hidden_dim, hidden_dim)
    p["wd3"], p["bd3"] = linear(keys[6], hidden_dim, output_dim)
    return p


def vae_forward_ref(obs, action, eps, params, *, max_action: float):
    """Pure-JAX reference mirroring the PyTorch forward (correctness check)."""
    relu = jax.nn.relu
    x = jnp.concatenate([obs, action], axis=1)
    h = relu(x @ params["we1"] + params["be1"])
    h = relu(h @ params["we2"] + params["be2"])
    mean = h @ params["wm"] + params["bm"]
    log_std = jnp.clip(h @ params["wls"] + params["bls"], -4.0, 15.0)
    std = jnp.exp(log_std)
    z = mean + std * eps
    xd = jnp.concatenate([obs, z], axis=1)
    a = relu(xd @ params["wd1"] + params["bd1"])
    a = relu(a @ params["wd2"] + params["bd2"])
    u = max_action * jnp.tanh(a @ params["wd3"] + params["bd3"])
    return u, mean, std


if __name__ == "__main__":
    # Small shapes consistent with the module's Linear layers.
    batch = 64
    input_dim = 16     # obs dim
    output_dim = 8     # action dim
    hidden_dim = 32
    latent_dim = 8
    max_action = 1.0

    key = jax.random.PRNGKey(0)
    k_obs, k_act, k_eps, k_params = jax.random.split(key, 4)

    obs = jax.random.normal(k_obs, (batch, input_dim), jnp.float32)
    action = jax.random.normal(k_act, (batch, output_dim), jnp.float32)
    # torch.randn_like(std) equivalent noise, supplied explicitly for determinism.
    eps = jax.random.normal(k_eps, (batch, latent_dim), jnp.float32)

    params = init_params(k_params, input_dim, output_dim, hidden_dim, latent_dim)

    # block_b=16 exercises a multi-step batch grid (grid=(4,)) at small batch.
    u, mean, std = vae_forward(obs, action, eps, params,
                               max_action=max_action, block_b=16)
    jax.block_until_ready((u, mean, std))

    u_r, mean_r, std_r = vae_forward_ref(obs, action, eps, params,
                                         max_action=max_action)
    assert jnp.allclose(u, u_r, atol=1e-4, rtol=1e-4)
    assert jnp.allclose(mean, mean_r, atol=1e-4, rtol=1e-4)
    assert jnp.allclose(std, std_r, atol=1e-4, rtol=1e-4)

    print("KERNEL_OK")
</pallas_src>

<mosaic_0001>
module attributes {stable_mosaic.version = 11 : i64} {
  func.func @_vae_kernel(%arg0: i32, %arg1: memref<16x16xf32, #tpu.memory_space<vmem>>, %arg2: memref<16x8xf32, #tpu.memory_space<vmem>>, %arg3: memref<16x128xf32, #tpu.memory_space<vmem>>, %arg4: memref<16x128xf32, #tpu.memory_space<vmem>>, %arg5: memref<8x128xf32, #tpu.memory_space<vmem>>, %arg6: memref<1x128xf32, #tpu.memory_space<vmem>>, %arg7: memref<128x128xf32, #tpu.memory_space<vmem>>, %arg8: memref<1x128xf32, #tpu.memory_space<vmem>>, %arg9: memref<128x256xf32, #tpu.memory_space<vmem>>, %arg10: memref<1x256xf32, #tpu.memory_space<vmem>>, %arg11: memref<16x128xf32, #tpu.memory_space<vmem>>, %arg12: memref<128x128xf32, #tpu.memory_space<vmem>>, %arg13: memref<1x128xf32, #tpu.memory_space<vmem>>, %arg14: memref<128x128xf32, #tpu.memory_space<vmem>>, %arg15: memref<1x128xf32, #tpu.memory_space<vmem>>, %arg16: memref<128x128xf32, #tpu.memory_space<vmem>>, %arg17: memref<1x128xf32, #tpu.memory_space<vmem>>, %arg18: memref<16x384xf32, #tpu.memory_space<vmem>>) attributes {dimension_semantics = [#tpu.dimension_semantics<parallel>], iteration_bounds = array<i64: 4>, scalar_prefetch = 0 : i64, scratch_operands = 0 : i64, tpu.core_type = #tpu.core_type<tc>, window_params = [{transform_indices = @transform_0, window_bounds = array<i64: 16, 16>}, {transform_indices = @transform_1, window_bounds = array<i64: 16, 8>}, {transform_indices = @transform_2, window_bounds = array<i64: 16, 128>}, {pipeline_mode = #tpu.pipeline_mode<synchronous>, transform_indices = @transform_3, window_bounds = array<i64: 16, 128>}, {pipeline_mode = #tpu.pipeline_mode<synchronous>, transform_indices = @transform_4, window_bounds = array<i64: 8, 128>}, {pipeline_mode = #tpu.pipeline_mode<synchronous>, transform_indices = @transform_5, window_bounds = array<i64: 1, 128>}, {pipeline_mode = #tpu.pipeline_mode<synchronous>, transform_indices = @transform_6, window_bounds = array<i64: 128, 128>}, {pipeline_mode = #tpu.pipeline_mode<synchronous>, transform_indices = @transform_7, window_bounds = array<i64: 1, 128>}, {pipeline_mode = #tpu.pipeline_mode<synchronous>, transform_indices = @transform_8, window_bounds = array<i64: 128, 256>}, {pipeline_mode = #tpu.pipeline_mode<synchronous>, transform_indices = @transform_9, window_bounds = array<i64: 1, 256>}, {pipeline_mode = #tpu.pipeline_mode<synchronous>, transform_indices = @transform_10, window_bounds = array<i64: 16, 128>}, {pipeline_mode = #tpu.pipeline_mode<synchronous>, transform_indices = @transform_11, window_bounds = array<i64: 128, 128>}, {pipeline_mode = #tpu.pipeline_mode<synchronous>, transform_indices = @transform_12, window_bounds = array<i64: 1, 128>}, {pipeline_mode = #tpu.pipeline_mode<synchronous>, transform_indices = @transform_13, window_bounds = array<i64: 128, 128>}, {pipeline_mode = #tpu.pipeline_mode<synchronous>, transform_indices = @transform_14, window_bounds = array<i64: 1, 128>}, {pipeline_mode = #tpu.pipeline_mode<synchronous>, transform_indices = @transform_15, window_bounds = array<i64: 128, 128>}, {pipeline_mode = #tpu.pipeline_mode<synchronous>, transform_indices = @transform_16, window_bounds = array<i64: 1, 128>}, {transform_indices = @transform_17, window_bounds = array<i64: 16, 384>}]} {
    %c0 = arith.constant 0 : index
    %c0_0 = arith.constant 0 : index
    %0 = vector.load %arg1[%c0, %c0_0] : memref<16x16xf32, #tpu.memory_space<vmem>>, vector<16x16xf32>
    %c0_1 = arith.constant 0 : index
    %c0_2 = arith.constant 0 : index
    %1 = vector.load %arg2[%c0_1, %c0_2] : memref<16x8xf32, #tpu.memory_space<vmem>>, vector<16x8xf32>
    %c0_3 = arith.constant 0 : index
    %c0_4 = arith.constant 0 : index
    %2 = vector.load %arg3[%c0_3, %c0_4] : memref<16x128xf32, #tpu.memory_space<vmem>>, vector<16x128xf32>
    %c0_5 = arith.constant 0 : index
    %c0_6 = arith.constant 0 : index
    %3 = vector.load %arg4[%c0_5, %c0_6] : memref<16x128xf32, #tpu.memory_space<vmem>>, vector<16x128xf32>
    %cst = arith.constant dense<0.000000e+00> : vector<16x128xf32>
    %4 = tpu.matmul %0, %3, %cst {dimension_numbers = #tpu.dot_dimension_numbers<[1], [0], [0], [1], [0, 0, 1, 1], [], []>} : vector<16x16xf32>, vector<16x128xf32>, vector<16x128xf32> -> vector<16x128xf32>
    %c0_7 = arith.constant 0 : index
    %c0_8 = arith.constant 0 : index
    %5 = vector.load %arg5[%c0_7, %c0_8] : memref<8x128xf32, #tpu.memory_space<vmem>>, vector<8x128xf32>
    %cst_9 = arith.constant dense<0.000000e+00> : vector<16x128xf32>
    %6 = tpu.matmul %1, %5, %cst_9 {dimension_numbers = #tpu.dot_dimension_numbers<[1], [0], [0], [1], [0, 0, 1, 1], [], []>} : vector<16x8xf32>, vector<8x128xf32>, vector<16x128xf32> -> vector<16x128xf32>
    %7 = arith.addf %4, %6 : vector<16x128xf32>
    %c0_10 = arith.constant 0 : index
    %c0_11 = arith.constant 0 : index
    %8 = vector.load %arg6[%c0_10, %c0_11] : memref<1x128xf32, #tpu.memory_space<vmem>>, vector<1x128xf32>
    %9 = vector.broadcast %8 : vector<1x128xf32> to vector<16x128xf32>
    %10 = arith.addf %7, %9 : vector<16x128xf32>
    %cst_12 = arith.constant 0.000000e+00 : f32
    %11 = vector.broadcast %cst_12 : f32 to vector<16x128xf32>
    %12 = arith.maximumf %10, %11 : vector<16x128xf32>
    %c0_13 = arith.constant 0 : index
    %c0_14 = arith.constant 0 : index
    %13 = vector.load %arg7[%c0_13, %c0_14] : memref<128x128xf32, #tpu.memory_space<vmem>>, vector<128x128xf32>
    %cst_15 = arith.constant dense<0.000000e+00> : vector<16x128xf32>
    %14 = tpu.matmul %12, %13, %cst_15 {dimension_numbers = #tpu.dot_dimension_numbers<[1], [0], [0], [1], [0, 0, 1, 1], [], []>} : vector<16x128xf32>, vector<128x128xf32>, vector<16x128xf32> -> vector<16x128xf32>
    %c0_16 = arith.constant 0 : index
    %c0_17 = arith.constant 0 : index
    %15 = vector.load %arg8[%c0_16, %c0_17] : memref<1x128xf32, #tpu.memory_space<vmem>>, vector<1x128xf32>
    %16 = vector.broadcast %15 : vector<1x128xf32> to vector<16x128xf32>
    %17 = arith.addf %14, %16 : vector<16x128xf32>
    %cst_18 = arith.constant 0.000000e+00 : f32
    %18 = vector.broadcast %cst_18 : f32 to vector<16x128xf32>
    %19 = arith.maximumf %17, %18 : vector<16x128xf32>
    %c0_19 = arith.constant 0 : index
    %c0_20 = arith.constant 0 : index
    %20 = vector.load %arg9[%c0_19, %c0_20] : memref<128x256xf32, #tpu.memory_space<vmem>>, vector<128x256xf32>
    %cst_21 = arith.constant dense<0.000000e+00> : vector<16x256xf32>
    %21 = tpu.matmul %19, %20, %cst_21 {dimension_numbers = #tpu.dot_dimension_numbers<[1], [0], [0], [1], [0, 0, 1, 1], [], []>} : vector<16x128xf32>, vector<128x256xf32>, vector<16x256xf32> -> vector<16x256xf32>
    %c0_22 = arith.constant 0 : index
    %c0_23 = arith.constant 0 : index
    %22 = vector.load %arg10[%c0_22, %c0_23] : memref<1x256xf32, #tpu.memory_space<vmem>>, vector<1x256xf32>
    %23 = vector.broadcast %22 : vector<1x256xf32> to vector<16x256xf32>
    %24 = arith.addf %21, %23 : vector<16x256xf32>
    %25 = vector.extract_strided_slice %24 {offsets = [0, 0], sizes = [16, 128], strides = [1, 1]} : vector<16x256xf32> to vector<16x128xf32>
    %26 = vector.extract_strided_slice %24 {offsets = [0, 128], sizes = [16, 128], strides = [1, 1]} : vector<16x256xf32> to vector<16x128xf32>
    %cst_24 = arith.constant -4.000000e+00 : f32
    %cst_25 = arith.constant 1.500000e+01 : f32
    %27 = vector.broadcast %cst_24 : f32 to vector<16x128xf32>
    %28 = arith.maximumf %27, %26 : vector<16x128xf32>
    %29 = vector.broadcast %cst_25 : f32 to vector<16x128xf32>
    %30 = arith.minimumf %29, %28 : vector<16x128xf32>
    %31 = math.exp %30 : vector<16x128xf32>
    %32 = arith.mulf %31, %2 : vector<16x128xf32>
    %33 = arith.addf %25, %32 : vector<16x128xf32>
    %c0_26 = arith.constant 0 : index
    %c0_27 = arith.constant 0 : index
    %34 = vector.load %arg11[%c0_26, %c0_27] : memref<16x128xf32, #tpu.memory_space<vmem>>, vector<16x128xf32>
    %cst_28 = arith.constant dense<0.000000e+00> : vector<16x128xf32>
    %35 = tpu.matmul %0, %34, %cst_28 {dimension_numbers = #tpu.dot_dimension_numbers<[1], [0], [0], [1], [0, 0, 1, 1], [], []>} : vector<16x16xf32>, vector<16x128xf32>, vector<16x128xf32> -> vector<16x128xf32>
    %c0_29 = arith.constant 0 : index
    %c0_30 = arith.constant 0 : index
    %36 = vector.load %arg12[%c0_29, %c0_30] : memref<128x128xf32, #tpu.memory_space<vmem>>, vector<128x128xf32>
    %cst_31 = arith.constant dense<0.000000e+00> : vector<16x128xf32>
    %37 = tpu.matmul %33, %36, %cst_31 {dimension_numbers = #tpu.dot_dimension_numbers<[1], [0], [0], [1], [0, 0, 1, 1], [], []>} : vector<16x128xf32>, vector<128x128xf32>, vector<16x128xf32> -> vector<16x128xf32>
    %38 = arith.addf %35, %37 : vector<16x128xf32>
    %c0_32 = arith.constant 0 : index
    %c0_33 = arith.constant 0 : index
    %39 = vector.load %arg13[%c0_32, %c0_33] : memref<1x128xf32, #tpu.memory_space<vmem>>, vector<1x128xf32>
    %40 = vector.broadcast %39 : vector<1x128xf32> to vector<16x128xf32>
    %41 = arith.addf %38, %40 : vector<16x128xf32>
    %cst_34 = arith.constant 0.000000e+00 : f32
    %42 = vector.broadcast %cst_34 : f32 to vector<16x128xf32>
    %43 = arith.maximumf %41, %42 : vector<16x128xf32>
    %c0_35 = arith.constant 0 : index
    %c0_36 = arith.constant 0 : index
    %44 = vector.load %arg14[%c0_35, %c0_36] : memref<128x128xf32, #tpu.memory_space<vmem>>, vector<128x128xf32>
    %cst_37 = arith.constant dense<0.000000e+00> : vector<16x128xf32>
    %45 = tpu.matmul %43, %44, %cst_37 {dimension_numbers = #tpu.dot_dimension_numbers<[1], [0], [0], [1], [0, 0, 1, 1], [], []>} : vector<16x128xf32>, vector<128x128xf32>, vector<16x128xf32> -> vector<16x128xf32>
    %c0_38 = arith.constant 0 : index
    %c0_39 = arith.constant 0 : index
    %46 = vector.load %arg15[%c0_38, %c0_39] : memref<1x128xf32, #tpu.memory_space<vmem>>, vector<1x128xf32>
    %47 = vector.broadcast %46 : vector<1x128xf32> to vector<16x128xf32>
    %48 = arith.addf %45, %47 : vector<16x128xf32>
    %cst_40 = arith.constant 0.000000e+00 : f32
    %49 = vector.broadcast %cst_40 : f32 to vector<16x128xf32>
    %50 = arith.maximumf %48, %49 : vector<16x128xf32>
    %c0_41 = arith.constant 0 : index
    %c0_42 = arith.constant 0 : index
    %51 = vector.load %arg16[%c0_41, %c0_42] : memref<128x128xf32, #tpu.memory_space<vmem>>, vector<128x128xf32>
    %cst_43 = arith.constant dense<0.000000e+00> : vector<16x128xf32>
    %52 = tpu.matmul %50, %51, %cst_43 {dimension_numbers = #tpu.dot_dimension_numbers<[1], [0], [0], [1], [0, 0, 1, 1], [], []>} : vector<16x128xf32>, vector<128x128xf32>, vector<16x128xf32> -> vector<16x128xf32>
    %c0_44 = arith.constant 0 : index
    %c0_45 = arith.constant 0 : index
    %53 = vector.load %arg17[%c0_44, %c0_45] : memref<1x128xf32, #tpu.memory_space<vmem>>, vector<1x128xf32>
    %54 = vector.broadcast %53 : vector<1x128xf32> to vector<16x128xf32>
    %55 = arith.addf %52, %54 : vector<16x128xf32>
    %56 = math.tanh %55 : vector<16x128xf32>
    %cst_46 = arith.constant 1.000000e+00 : f32
    %57 = vector.broadcast %cst_46 : f32 to vector<16x128xf32>
    %58 = arith.mulf %57, %56 : vector<16x128xf32>
    %c0_47 = arith.constant 0 : index
    %c0_48 = arith.constant 0 : index
    %59 = vector.load %arg18[%c0_47, %c0_48] : memref<16x384xf32, #tpu.memory_space<vmem>>, vector<16x128xf32>
    tpu.vector_store %arg18[%c0_47, %c0_48], %58 {strides = array<i32>} : memref<16x384xf32, #tpu.memory_space<vmem>>, vector<16x128xf32>,
    %c0_49 = arith.constant 0 : index
    %c128 = arith.constant 128 : index
    %60 = vector.load %arg18[%c0_49, %c128] : memref<16x384xf32, #tpu.memory_space<vmem>>, vector<16x128xf32>
    tpu.vector_store %arg18[%c0_49, %c128], %25 {strides = array<i32>} : memref<16x384xf32, #tpu.memory_space<vmem>>, vector<16x128xf32>,
    %c0_50 = arith.constant 0 : index
    %c256 = arith.constant 256 : index
    %61 = vector.load %arg18[%c0_50, %c256] : memref<16x384xf32, #tpu.memory_space<vmem>>, vector<16x128xf32>
    tpu.vector_store %arg18[%c0_50, %c256], %31 {strides = array<i32>} : memref<16x384xf32, #tpu.memory_space<vmem>>, vector<16x128xf32>,
    return
  }
  func.func @transform_0(%arg0: i32) -> (i32, i32) {
    %c0_i32 = arith.constant 0 : i32
    %c0_i32_0 = arith.constant 0 : i32
    return %arg0, %c0_i32 : i32, i32
  }
  func.func @transform_1(%arg0: i32) -> (i32, i32) {
    %c0_i32 = arith.constant 0 : i32
    %c0_i32_0 = arith.constant 0 : i32
    return %arg0, %c0_i32 : i32, i32
  }
  func.func @transform_2(%arg0: i32) -> (i32, i32) {
    %c0_i32 = arith.constant 0 : i32
    %c0_i32_0 = arith.constant 0 : i32
    return %arg0, %c0_i32 : i32, i32
  }
  func.func @transform_3(%arg0: i32) -> (i32, i32) {
    %c0_i32 = arith.constant 0 : i32
    %c0_i32_0 = arith.constant 0 : i32
    %c0_i32_1 = arith.constant 0 : i32
    return %c0_i32, %c0_i32_0 : i32, i32
  }
  func.func @transform_4(%arg0: i32) -> (i32, i32) {
    %c0_i32 = arith.constant 0 : i32
    %c0_i32_0 = arith.constant 0 : i32
    %c0_i32_1 = arith.constant 0 : i32
    return %c0_i32, %c0_i32_0 : i32, i32
  }
  func.func @transform_5(%arg0: i32) -> (i32, i32) {
    %c0_i32 = arith.constant 0 : i32
    %c0_i32_0 = arith.constant 0 : i32
    %c0_i32_1 = arith.constant 0 : i32
    return %c0_i32, %c0_i32_0 : i32, i32
  }
  func.func @transform_6(%arg0: i32) -> (i32, i32) {
    %c0_i32 = arith.constant 0 : i32
    %c0_i32_0 = arith.constant 0 : i32
    %c0_i32_1 = arith.constant 0 : i32
    return %c0_i32, %c0_i32_0 : i32, i32
  }
  func.func @transform_7(%arg0: i32) -> (i32, i32) {
    %c0_i32 = arith.constant 0 : i32
    %c0_i32_0 = arith.constant 0 : i32
    %c0_i32_1 = arith.constant 0 : i32
    return %c0_i32, %c0_i32_0 : i32, i32
  }
  func.func @transform_8(%arg0: i32) -> (i32, i32) {
    %c0_i32 = arith.constant 0 : i32
    %c0_i32_0 = arith.constant 0 : i32
    %c0_i32_1 = arith.constant 0 : i32
    return %c0_i32, %c0_i32_0 : i32, i32
  }
  func.func @transform_9(%arg0: i32) -> (i32, i32) {
    %c0_i32 = arith.constant 0 : i32
    %c0_i32_0 = arith.constant 0 : i32
    %c0_i32_1 = arith.constant 0 : i32
    return %c0_i32, %c0_i32_0 : i32, i32
  }
  func.func @transform_10(%arg0: i32) -> (i32, i32) {
    %c0_i32 = arith.constant 0 : i32
    %c0_i32_0 = arith.constant 0 : i32
    %c0_i32_1 = arith.constant 0 : i32
    return %c0_i32, %c0_i32_0 : i32, i32
  }
  func.func @transform_11(%arg0: i32) -> (i32, i32) {
    %c0_i32 = arith.constant 0 : i32
    %c0_i32_0 = arith.constant 0 : i32
    %c0_i32_1 = arith.constant 0 : i32
    return %c0_i32, %c0_i32_0 : i32, i32
  }
  func.func @transform_12(%arg0: i32) -> (i32, i32) {
    %c0_i32 = arith.constant 0 : i32
    %c0_i32_0 = arith.constant 0 : i32
    %c0_i32_1 = arith.constant 0 : i32
    return %c0_i32, %c0_i32_0 : i32, i32
  }
  func.func @transform_13(%arg0: i32) -> (i32, i32) {
    %c0_i32 = arith.constant 0 : i32
    %c0_i32_0 = arith.constant 0 : i32
    %c0_i32_1 = arith.constant 0 : i32
    return %c0_i32, %c0_i32_0 : i32, i32
  }
  func.func @transform_14(%arg0: i32) -> (i32, i32) {
    %c0_i32 = arith.constant 0 : i32
    %c0_i32_0 = arith.constant 0 : i32
    %c0_i32_1 = arith.constant 0 : i32
    return %c0_i32, %c0_i32_0 : i32, i32
  }
  func.func @transform_15(%arg0: i32) -> (i32, i32) {
    %c0_i32 = arith.constant 0 : i32
    %c0_i32_0 = arith.constant 0 : i32
    %c0_i32_1 = arith.constant 0 : i32
    return %c0_i32, %c0_i32_0 : i32, i32
  }
  func.func @transform_16(%arg0: i32) -> (i32, i32) {
    %c0_i32 = arith.constant 0 : i32
    %c0_i32_0 = arith.constant 0 : i32
    %c0_i32_1 = arith.constant 0 : i32
    return %c0_i32, %c0_i32_0 : i32, i32
  }
  func.func @transform_17(%arg0: i32) -> (i32, i32) {
    %c0_i32 = arith.constant 0 : i32
    %c0_i32_0 = arith.constant 0 : i32
    return %arg0, %c0_i32 : i32, i32
  }
}

</mosaic_0001>

<llo_original>
// kernel: tpu_custom_call.1
$region0: #{tpu_custom_call.1}
  #allocation0 [shape = 'u32[]', space=smem, size = 0x4, offset = 0x4, fixed_abs, tag = 'smem constant byte address 0x4 - core index']
  #allocation1 [shape = 'u32[72,128]{1,0:T(1,128)}', space=vmem, size = 0x9000, scoped, tag = 'internal scratch']
  %s0 = inlined_call_operand.vmem [shape: f32[64,16], index: 0, kind: input, shape index: {}]
  %s1 = inlined_call_operand.vmem [shape: f32[64,8], index: 1, kind: input, shape index: {}]
  %s2 = inlined_call_operand.hbm [shape: f32[64,128], index: 2, kind: input, shape index: {}]
  %s3 = inlined_call_operand.vmem [shape: f32[16,128], index: 3, kind: input, shape index: {}]
  %s4 = inlined_call_operand.hbm [shape: f32[8,128], index: 4, kind: input, shape index: {}]
  %s5 = inlined_call_operand.vmem [shape: f32[1,128], index: 5, kind: input, shape index: {}]
  %s6 = inlined_call_operand.vmem [shape: f32[128,128], index: 6, kind: input, shape index: {}]
  %s7 = inlined_call_operand.vmem [shape: f32[1,128], index: 7, kind: input, shape index: {}]
  %s8 = inlined_call_operand.hbm [shape: f32[128,256], index: 8, kind: input, shape index: {}]
  %s9 = inlined_call_operand.vmem [shape: f32[1,256], index: 9, kind: input, shape index: {}]
  %s10 = inlined_call_operand.hbm [shape: f32[16,128], index: 10, kind: input, shape index: {}]
  %s11 = inlined_call_operand.hbm [shape: f32[128,128], index: 11, kind: input, shape index: {}]
  %s12 = inlined_call_operand.vmem [shape: f32[1,128], index: 12, kind: input, shape index: {}]
  %s13 = inlined_call_operand.hbm [shape: f32[128,128], index: 13, kind: input, shape index: {}]
  %s14 = inlined_call_operand.vmem [shape: f32[1,128], index: 14, kind: input, shape index: {}]
  %s15 = inlined_call_operand.hbm [shape: f32[128,128], index: 15, kind: input, shape index: {}]
  %s16 = inlined_call_operand.vmem [shape: f32[1,128], index: 16, kind: input, shape index: {}]
  %s17 = inlined_call_operand.hbm [shape: f32[64,384], index: 17, kind: output, shape index: {}]
  %s18 = sld [smem:[#allocation0]]
  $region129: #{tpu_custom_call.1} parent=0
    _
  %s20 = ssub.s32 1, %s18
  %s21 = scalar_select 0, %s20, %s18
  $region1: #{tpu_custom_call.1} parent=0
    #allocation2 [shape = 'u8[16384]{0}', space=vmem, size = 0x4000, scoped, tag = 'input window, operand 2']
    #allocation3 [shape = 's32[2]{0}', space=sflag, size = 0x8, scoped, tag = 'scoped memory for tpu_custom_call.1']
    #allocation4 [shape = 's32[2]{0}', space=sflag, size = 0x8, scoped, tag = 'scoped memory for tpu_custom_call.1']
    #allocation5 [shape = 'u8[4096]{0}', space=vmem, size = 0x1000, scoped, tag = 'input window, operand 4, single buffered']
    #allocation6 [shape = 's32[1]{0}', space=sflag, size = 0x4, scoped, tag = 'scoped memory for tpu_custom_call.1']
    #allocation7 [shape = 'u8[131072]{0}', space=vmem, size = 0x20000, scoped, tag = 'input window, operand 8, single buffered']
    #allocation8 [shape = 'u8[8192]{0}', space=vmem, size = 0x2000, scoped, tag = 'input window, operand 10, single buffered']
    #allocation9 [shape = 's32[1]{0}', space=sflag, size = 0x4, scoped, tag = 'scoped memory for tpu_custom_call.1']
    #allocation10 [shape = 'u8[65536]{0}', space=vmem, size = 0x10000, scoped, tag = 'input window, operand 11, single buffered']
    #allocation11 [shape = 'u8[65536]{0}', space=vmem, size = 0x10000, scoped, tag = 'input window, operand 13, single buffered']
    #allocation12 [shape = 's32[1]{0}', space=sflag, size = 0x4, scoped, tag = 'scoped memory for tpu_custom_call.1']
    #allocation13 [shape = 'u8[65536]{0}', space=vmem, size = 0x10000, scoped, tag = 'input window, operand 15, single buffered']
    #allocation14 [shape = 'u8[49152]{0}', space=vmem, size = 0xc000, scoped, tag = 'output window, operand 0']
    %22 = vsyncpa [#allocation3], 0
    %s23 = scalar_lea.sflag [#allocation3], 1
    %24 = vsyncpa %s23, 0
    %25 = vsyncpa [#allocation6], 0
    %26 = vsyncpa [#allocation9], 0
    %27 = vsyncpa [#allocation12], 0
    %28 = vsyncpa [#allocation4], 0
    %s29 = scalar_lea.sflag [#allocation4], 1
    %30 = vsyncpa %s29, 0
    loop: start=0, step=1, limit=6
    $region2: #{tpu_custom_call.1} parent=1 // loop_pre_header
      _
    $region3: #{tpu_custom_call.1} parent=1 // loop_header
      %s32 = sphi 0, %s36
      %p33 = scmp.ge.s32.totalorder %s32, 6
      %s42 = sphi 0, %s44
      %s45 = sphi 0, %s42
      %s46 = sphi 0, %s45
      %s62 = sphi 0, %s46
      %s68 = sphi 0, %s70
      %s71 = sphi 0, %s68
      %s72 = sphi 0, %s71
      %s88 = sphi 0, %s72
      %s94 = sphi 0, %s96
      %s97 = sphi 0, %s94
      %s98 = sphi 0, %s97
      %s114 = sphi 0, %s98
      %s118 = sphi 0, %s118
      %s120 = sphi 0, %s118
      %s121 = sphi 0, %s120
      %s135 = sphi 0, %s121
      %s139 = sphi 0, %s139
      %s141 = sphi 0, %s139
      %s142 = sphi 0, %s141
      %s156 = sphi 0, %s142
      %s160 = sphi 0, %s160
      %s162 = sphi 0, %s160
      %s163 = sphi 0, %s162
      %s177 = sphi 0, %s163
      %s181 = sphi 0, %s181
      %s183 = sphi 0, %s181
      %s184 = sphi 0, %s183
      %s198 = sphi 0, %s184
      %s202 = sphi 0, %s202
      %s204 = sphi 0, %s202
      %s205 = sphi 0, %s204
      %s219 = sphi 0, %s205
      %s223 = sphi 0, %s223
      %s225 = sphi 0, %s223
      %s226 = sphi 0, %s225
      %s240 = sphi 0, %s226
      %s244 = sphi 0, %s244
      %s246 = sphi 0, %s244
      %s247 = sphi 0, %s246
      %s261 = sphi 0, %s247
      %s265 = sphi 0, %s265
      %s267 = sphi 0, %s265
      %s268 = sphi 0, %s267
      %s282 = sphi 0, %s268
      %s286 = sphi 0, %s286
      %s288 = sphi 0, %s286
      %s289 = sphi 0, %s288
      %s303 = sphi 0, %s289
      %s307 = sphi 0, %s307
      %s309 = sphi 0, %s307
      %s310 = sphi 0, %s309
      %s324 = sphi 0, %s310
      %s328 = sphi 0, %s328
      %s330 = sphi 0, %s328
      %s331 = sphi 0, %s330
      %s345 = sphi 0, %s331
      %s349 = sphi 0, %s349
      %s351 = sphi 0, %s349
      %s352 = sphi 0, %s351
      %s366 = sphi 0, %s352
      %s370 = sphi 0, %s370
      %s372 = sphi 0, %s370
      %s373 = sphi 0, %s372
      %s387 = sphi 0, %s373
      %s391 = sphi 0, %s391
      %s393 = sphi 0, %s391
      %s394 = sphi 0, %s393
      %s408 = sphi 0, %s394
      %s414 = sphi 0, %s416
      %s417 = sphi 0, %s414
      %s418 = sphi 0, %s417
      %s434 = sphi 0, %s418
    $region4: #{tpu_custom_call.1} parent=1 // loop_header_branch
      %35 = sbr.rel (%p33) target = $region8
    $region5: #{tpu_custom_call.1} parent=1 // loop_body
      %s37 = ssub.s32 %s32, 1
      %s38 = ssub.s32 %s32, 2
      %s39 = sadd.s32 %s32, 1
      %s40 = ssub.s32 %s32, %s39
      %p41 = scmp.eq.s32.totalorder %s40, 0
      %s43 = sadd.s32 %s42, 1
      %s44 = scalar_select %p41, %s42, %s43
      %p47 = pneg %p41
      %p48 = scmp.eq.s32.totalorder %s32, 3
      %p49 = por %p47, %p48
      %p50 = scmp.ne.s32.totalorder %s42, %s45
      %p51 = scmp.eq.s32.totalorder %s32, 0
      %p52 = por %p50, %p51
      %p53 = scmp.ne.s32.totalorder %s42, %s45
      %p54 = scmp.eq.s32.totalorder %s37, 3
      %p55 = por %p53, %p54
      %p56 = scmp.ne.s32.totalorder %s45, %s46
      %p57 = scmp.eq.s32.totalorder %s37, 0
      %p58 = por %p56, %p57
      %p59 = scmp.ne.s32.totalorder %s45, %s46
      %p60 = scmp.eq.s32.totalorder %s38, 3
      %p61 = por %p59, %p60
      %p63 = scmp.ne.s32.totalorder %s46, %s62
      %p64 = scmp.eq.s32.totalorder %s38, 0
      %p65 = por %p63, %p64
      %s66 = ssub.s32 %s32, %s39
      %p67 = scmp.eq.s32.totalorder %s66, 0
      %s69 = sadd.s32 %s68, 1
      %s70 = scalar_select %p67, %s68, %s69
      %p73 = pneg %p67
      %p74 = scmp.eq.s32.totalorder %s32, 3
      %p75 = por %p73, %p74
      %p76 = scmp.ne.s32.totalorder %s68, %s71
      %p77 = scmp.eq.s32.totalorder %s32, 0
      %p78 = por %p76, %p77
      %p79 = scmp.ne.s32.totalorder %s68, %s71
      %p80 = scmp.eq.s32.totalorder %s37, 3
      %p81 = por %p79, %p80
      %p82 = scmp.ne.s32.totalorder %s71, %s72
      %p83 = scmp.eq.s32.totalorder %s37, 0
      %p84 = por %p82, %p83
      %p85 = scmp.ne.s32.totalorder %s71, %s72
      %p86 = scmp.eq.s32.totalorder %s38, 3
      %p87 = por %p85, %p86
      %p89 = scmp.ne.s32.totalorder %s72, %s88
      %p90 = scmp.eq.s32.totalorder %s38, 0
      %p91 = por %p89, %p90
      %s92 = ssub.s32 %s32, %s39
      %p93 = scmp.eq.s32.totalorder %s92, 0
      %s95 = sadd.s32 %s94, 1
      %s96 = scalar_select %p93, %s94, %s95
      %p99 = pneg %p93
      %p100 = scmp.eq.s32.totalorder %s32, 3
      %p101 = por %p99, %p100
      %p102 = scmp.ne.s32.totalorder %s94, %s97
      %p103 = scmp.eq.s32.totalorder %s32, 0
      %p104 = por %p102, %p103
      %p105 = scmp.ne.s32.totalorder %s94, %s97
      %p106 = scmp.eq.s32.totalorder %s37, 3
      %p107 = por %p105, %p106
      %p108 = scmp.ne.s32.totalorder %s97, %s98
      %p109 = scmp.eq.s32.totalorder %s37, 0
      %p110 = por %p108, %p109
      %p111 = scmp.ne.s32.totalorder %s97, %s98
      %p112 = scmp.eq.s32.totalorder %s38, 3
      %p113 = por %p111, %p112
      %p115 = scmp.ne.s32.totalorder %s98, %s114
      %p116 = scmp.eq.s32.totalorder %s38, 0
      %p117 = por %p115, %p116
      %s119 = sadd.s32 %s118, 1
      %p122 = scmp.eq.s32.totalorder %s32, 3
      %p123 = scmp.ne.s32.totalorder %s118, %s120
      %p124 = scmp.eq.s32.totalorder %s32, 0
      %p125 = por %p123, %p124
      %p126 = scmp.ne.s32.totalorder %s118, %s120
      %p127 = scmp.eq.s32.totalorder %s37, 3
      %p128 = por %p126, %p127
      %p129 = scmp.ne.s32.totalorder %s120, %s121
      %p130 = scmp.eq.s32.totalorder %s37, 0
      %p131 = por %p129, %p130
      %p132 = scmp.ne.s32.totalorder %s120, %s121
      %p133 = scmp.eq.s32.totalorder %s38, 3
      %p134 = por %p132, %p133
      %p136 = scmp.ne.s32.totalorder %s121, %s135
      %p137 = scmp.eq.s32.totalorder %s38, 0
      %p138 = por %p136, %p137
      %s140 = sadd.s32 %s139, 1
      %p143 = scmp.eq.s32.totalorder %s32, 3
      %p144 = scmp.ne.s32.totalorder %s139, %s141
      %p145 = scmp.eq.s32.totalorder %s32, 0
      %p146 = por %p144, %p145
      %p147 = scmp.ne.s32.totalorder %s139, %s141
      %p148 = scmp.eq.s32.totalorder %s37, 3
      %p149 = por %p147, %p148
      %p150 = scmp.ne.s32.totalorder %s141, %s142
      %p151 = scmp.eq.s32.totalorder %s37, 0
      %p152 = por %p150, %p151
      %p153 = scmp.ne.s32.totalorder %s141, %s142
      %p154 = scmp.eq.s32.totalorder %s38, 3
      %p155 = por %p153, %p154
      %p157 = scmp.ne.s32.totalorder %s142, %s156
      %p158 = scmp.eq.s32.totalorder %s38, 0
      %p159 = por %p157, %p158
      %s161 = sadd.s32 %s160, 1
      %p164 = scmp.eq.s32.totalorder %s32, 3
      %p165 = scmp.ne.s32.totalorder %s160, %s162
      %p166 = scmp.eq.s32.totalorder %s32, 0
      %p167 = por %p165, %p166
      %p168 = scmp.ne.s32.totalorder %s160, %s162
      %p169 = scmp.eq.s32.totalorder %s37, 3
      %p170 = por %p168, %p169
      %p171 = scmp.ne.s32.totalorder %s162, %s163
      %p172 = scmp.eq.s32.totalorder %s37, 0
      %p173 = por %p171, %p172
      %p174 = scmp.ne.s32.totalorder %s162, %s163
      %p175 = scmp.eq.s32.totalorder %s38, 3
      %p176 = por %p174, %p175
      %p178 = scmp.ne.s32.totalorder %s163, %s177
      %p179 = scmp.eq.s32.totalorder %s38, 0
      %p180 = por %p178, %p179
      %s182 = sadd.s32 %s181, 1
      %p185 = scmp.eq.s32.totalorder %s32, 3
      %p186 = scmp.ne.s32.totalorder %s181, %s183
      %p187 = scmp.eq.s32.totalorder %s32, 0
      %p188 = por %p186, %p187
      %p189 = scmp.ne.s32.totalorder %s181, %s183
      %p190 = scmp.eq.s32.totalorder %s37, 3
      %p191 = por %p189, %p190
      %p192 = scmp.ne.s32.totalorder %s183, %s184
      %p193 = scmp.eq.s32.totalorder %s37, 0
      %p194 = por %p192, %p193
      %p195 = scmp.ne.s32.totalorder %s183, %s184
      %p196 = scmp.eq.s32.totalorder %s38, 3
      %p197 = por %p195, %p196
      %p199 = scmp.ne.s32.totalorder %s184, %s198
      %p200 = scmp.eq.s32.totalorder %s38, 0
      %p201 = por %p199, %p200
      %s203 = sadd.s32 %s202, 1
      %p206 = scmp.eq.s32.totalorder %s32, 3
      %p207 = scmp.ne.s32.totalorder %s202, %s204
      %p208 = scmp.eq.s32.totalorder %s32, 0
      %p209 = por %p207, %p208
      %p210 = scmp.ne.s32.totalorder %s202, %s204
      %p211 = scmp.eq.s32.totalorder %s37, 3
      %p212 = por %p210, %p211
      %p213 = scmp.ne.s32.totalorder %s204, %s205
      %p214 = scmp.eq.s32.totalorder %s37, 0
      %p215 = por %p213, %p214
      %p216 = scmp.ne.s32.totalorder %s204, %s205
      %p217 = scmp.eq.s32.totalorder %s38, 3
      %p218 = por %p216, %p217
      %p220 = scmp.ne.s32.totalorder %s205, %s219
      %p221 = scmp.eq.s32.totalorder %s38, 0
      %p222 = por %p220, %p221
      %s224 = sadd.s32 %s223, 1
      %p227 = scmp.eq.s32.totalorder %s32, 3
      %p228 = scmp.ne.s32.totalorder %s223, %s225
      %p229 = scmp.eq.s32.totalorder %s32, 0
      %p230 = por %p228, %p229
      %p231 = scmp.ne.s32.totalorder %s223, %s225
      %p232 = scmp.eq.s32.totalorder %s37, 3
      %p233 = por %p231, %p232
      %p234 = scmp.ne.s32.totalorder %s225, %s226
      %p235 = scmp.eq.s32.totalorder %s37, 0
      %p236 = por %p234, %p235
      %p237 = scmp.ne.s32.totalorder %s225, %s226
      %p238 = scmp.eq.s32.totalorder %s38, 3
      %p239 = por %p237, %p238
      %p241 = scmp.ne.s32.totalorder %s226, %s240
      %p242 = scmp.eq.s32.totalorder %s38, 0
      %p243 = por %p241, %p242
      %s245 = sadd.s32 %s244, 1
      %p248 = scmp.eq.s32.totalorder %s32, 3
      %p249 = scmp.ne.s32.totalorder %s244, %s246
      %p250 = scmp.eq.s32.totalorder %s32, 0
      %p251 = por %p249, %p250
      %p252 = scmp.ne.s32.totalorder %s244, %s246
      %p253 = scmp.eq.s32.totalorder %s37, 3
      %p254 = por %p252, %p253
      %p255 = scmp.ne.s32.totalorder %s246, %s247
      %p256 = scmp.eq.s32.totalorder %s37, 0
      %p257 = por %p255, %p256
      %p258 = scmp.ne.s32.totalorder %s246, %s247
      %p259 = scmp.eq.s32.totalorder %s38, 3
      %p260 = por %p258, %p259
      %p262 = scmp.ne.s32.totalorder %s247, %s261
      %p263 = scmp.eq.s32.totalorder %s38, 0
      %p264 = por %p262, %p263
      %s266 = sadd.s32 %s265, 1
      %p269 = scmp.eq.s32.totalorder %s32, 3
      %p270 = scmp.ne.s32.totalorder %s265, %s267
      %p271 = scmp.eq.s32.totalorder %s32, 0
      %p272 = por %p270, %p271
      %p273 = scmp.ne.s32.totalorder %s265, %s267
      %p274 = scmp.eq.s32.totalorder %s37, 3
      %p275 = por %p273, %p274
      %p276 = scmp.ne.s32.totalorder %s267, %s268
      %p277 = scmp.eq.s32.totalorder %s37, 0
      %p278 = por %p276, %p277
      %p279 = scmp.ne.s32.totalorder %s267, %s268
      %p280 = scmp.eq.s32.totalorder %s38, 3
      %p281 = por %p279, %p280
      %p283 = scmp.ne.s32.totalorder %s268, %s282
      %p284 = scmp.eq.s32.totalorder %s38, 0
      %p285 = por %p283, %p284
      %s287 = sadd.s32 %s286, 1
      %p290 = scmp.eq.s32.totalorder %s32, 3
      %p291 = scmp.ne.s32.totalorder %s286, %s288
      %p292 = scmp.eq.s32.totalorder %s32, 0
      %p293 = por %p291, %p292
      %p294 = scmp.ne.s32.totalorder %s286, %s288
      %p295 = scmp.eq.s32.totalorder %s37, 3
      %p296 = por %p294, %p295
      %p297 = scmp.ne.s32.totalorder %s288, %s289
      %p298 = scmp.eq.s32.totalorder %s37, 0
      %p299 = por %p297, %p298
      %p300 = scmp.ne.s32.totalorder %s288, %s289
      %p301 = scmp.eq.s32.totalorder %s38, 3
      %p302 = por %p300, %p301
      %p304 = scmp.ne.s32.totalorder %s289, %s303
      %p305 = scmp.eq.s32.totalorder %s38, 0
      %p306 = por %p304, %p305
      %s308 = sadd.s32 %s307, 1
      %p311 = scmp.eq.s32.totalorder %s32, 3
      %p312 = scmp.ne.s32.totalorder %s307, %s309
      %p313 = scmp.eq.s32.totalorder %s32, 0
      %p314 = por %p312, %p313
      %p315 = scmp.ne.s32.totalorder %s307, %s309
      %p316 = scmp.eq.s32.totalorder %s37, 3
      %p317 = por %p315, %p316
      %p318 = scmp.ne.s32.totalorder %s309, %s310
      %p319 = scmp.eq.s32.totalorder %s37, 0
      %p320 = por %p318, %p319
      %p321 = scmp.ne.s32.totalorder %s309, %s310
      %p322 = scmp.eq.s32.totalorder %s38, 3
      %p323 = por %p321, %p322
      %p325 = scmp.ne.s32.totalorder %s310, %s324
      %p326 = scmp.eq.s32.totalorder %s38, 0
      %p327 = por %p325, %p326
      %s329 = sadd.s32 %s328, 1
      %p332 = scmp.eq.s32.totalorder %s32, 3
      %p333 = scmp.ne.s32.totalorder %s328, %s330
      %p334 = scmp.eq.s32.totalorder %s32, 0
      %p335 = por %p333, %p334
      %p336 = scmp.ne.s32.totalorder %s328, %s330
      %p337 = scmp.eq.s32.totalorder %s37, 3
      %p338 = por %p336, %p337
      %p339 = scmp.ne.s32.totalorder %s330, %s331
      %p340 = scmp.eq.s32.totalorder %s37, 0
      %p341 = por %p339, %p340
      %p342 = scmp.ne.s32.totalorder %s330, %s331
      %p343 = scmp.eq.s32.totalorder %s38, 3
      %p344 = por %p342, %p343
      %p346 = scmp.ne.s32.totalorder %s331, %s345
      %p347 = scmp.eq.s32.totalorder %s38, 0
      %p348 = por %p346, %p347
      %s350 = sadd.s32 %s349, 1
      %p353 = scmp.eq.s32.totalorder %s32, 3
      %p354 = scmp.ne.s32.totalorder %s349, %s351
      %p355 = scmp.eq.s32.totalorder %s32, 0
      %p356 = por %p354, %p355
      %p357 = scmp.ne.s32.totalorder %s349, %s351
      %p358 = scmp.eq.s32.totalorder %s37, 3
      %p359 = por %p357, %p358
      %p360 = scmp.ne.s32.totalorder %s351, %s352
      %p361 = scmp.eq.s32.totalorder %s37, 0
      %p362 = por %p360, %p361
      %p363 = scmp.ne.s32.totalorder %s351, %s352
      %p364 = scmp.eq.s32.totalorder %s38, 3
      %p365 = por %p363, %p364
      %p367 = scmp.ne.s32.totalorder %s352, %s366
      %p368 = scmp.eq.s32.totalorder %s38, 0
      %p369 = por %p367, %p368
      %s371 = sadd.s32 %s370, 1
      %p374 = scmp.eq.s32.totalorder %s32, 3
      %p375 = scmp.ne.s32.totalorder %s370, %s372
      %p376 = scmp.eq.s32.totalorder %s32, 0
      %p377 = por %p375, %p376
      %p378 = scmp.ne.s32.totalorder %s370, %s372
      %p379 = scmp.eq.s32.totalorder %s37, 3
      %p380 = por %p378, %p379
      %p381 = scmp.ne.s32.totalorder %s372, %s373
      %p382 = scmp.eq.s32.totalorder %s37, 0
      %p383 = por %p381, %p382
      %p384 = scmp.ne.s32.totalorder %s372, %s373
      %p385 = scmp.eq.s32.totalorder %s38, 3
      %p386 = por %p384, %p385
      %p388 = scmp.ne.s32.totalorder %s373, %s387
      %p389 = scmp.eq.s32.totalorder %s38, 0
      %p390 = por %p388, %p389
      %s392 = sadd.s32 %s391, 1
      %p395 = scmp.eq.s32.totalorder %s32, 3
      %p396 = scmp.ne.s32.totalorder %s391, %s393
      %p397 = scmp.eq.s32.totalorder %s32, 0
      %p398 = por %p396, %p397
      %p399 = scmp.ne.s32.totalorder %s391, %s393
      %p400 = scmp.eq.s32.totalorder %s37, 3
      %p401 = por %p399, %p400
      %p402 = scmp.ne.s32.totalorder %s393, %s394
      %p403 = scmp.eq.s32.totalorder %s37, 0
      %p404 = por %p402, %p403
      %p405 = scmp.ne.s32.totalorder %s393, %s394
      %p406 = scmp.eq.s32.totalorder %s38, 3
      %p407 = por %p405, %p406
      %p409 = scmp.ne.s32.totalorder %s394, %s408
      %p410 = scmp.eq.s32.totalorder %s38, 0
      %p411 = por %p409, %p410
      %s412 = ssub.s32 %s32, %s39
      %p413 = scmp.eq.s32.totalorder %s412, 0
      %s415 = sadd.s32 %s414, 1
      %s416 = scalar_select %p413, %s414, %s415
      %p419 = pneg %p413
      %p420 = scmp.eq.s32.totalorder %s32, 3
      %p421 = por %p419, %p420
      %p422 = scmp.ne.s32.totalorder %s414, %s417
      %p423 = scmp.eq.s32.totalorder %s32, 0
      %p424 = por %p422, %p423
      %p425 = scmp.ne.s32.totalorder %s414, %s417
      %p426 = scmp.eq.s32.totalorder %s37, 3
      %p427 = por %p425, %p426
      %p428 = scmp.ne.s32.totalorder %s417, %s418
      %p429 = scmp.eq.s32.totalorder %s37, 0
      %p430 = por %p428, %p429
      %p431 = scmp.ne.s32.totalorder %s417, %s418
      %p432 = scmp.eq.s32.totalorder %s38, 3
      %p433 = por %p431, %p432
      %p435 = scmp.ne.s32.totalorder %s418, %s434
      %p436 = scmp.eq.s32.totalorder %s38, 0
      %p437 = por %p435, %p436
      %p438 = scmp.le.s32.totalorder 1, %s32
      %p439 = scmp.lt.s32.totalorder %s32, 5
      %p440 = pnand %p438, %p439
      %p441 = pneg %p440
      // Predicated region
      $region9: #{tpu_custom_call.1} parent=5 // pred_check
        _
      $region10: #{tpu_custom_call.1} parent=5 // pred_check_branch
        %443 = sbr.rel (%p440) target = $region12
      $region11: #{tpu_custom_call.1} parent=5 // pred_region
        %s444 = ssub.s32 %s32, 1
        // Predicated region
        $region13: #{tpu_custom_call.1} parent=11 // pred_check
          %p445 = pneg %p131
        $region14: #{tpu_custom_call.1} parent=11 // pred_check_branch
          %447 = sbr.rel (%p445) target = $region16
        $region15: #{tpu_custom_call.1} parent=11 // pred_region
          _
        $region16: #{tpu_custom_call.1} parent=11 // pred_fallthru
          _
        // Predicated region
        $region17: #{tpu_custom_call.1} parent=11 // pred_check
          %p448 = pneg %p152
        $region18: #{tpu_custom_call.1} parent=11 // pred_check_branch
          %450 = sbr.rel (%p448) target = $region20
        $region19: #{tpu_custom_call.1} parent=11 // pred_region
          %452 = vsyncadd [#allocation6], 0
          %s454 = sshll.u32 %s4, 4
          %s455 = int_to_ptr.hbm [resolvable:$true] %s454
          %s456 = sshll.u32 [#allocation5], 4
          %s457 = int_to_ptr.vmem [resolvable:$true] %s456
          %459 = dma.hbm_to_vmem [thread:$0]  %s455, 128, %s457, [#allocation6]
        $region20: #{tpu_custom_call.1} parent=11 // pred_fallthru
          _
        // Predicated region
        $region21: #{tpu_custom_call.1} parent=11 // pred_check
          %p460 = pneg %p173
        $region22: #{tpu_custom_call.1} parent=11 // pred_check_branch
          %462 = sbr.rel (%p460) target = $region24
        $region23: #{tpu_custom_call.1} parent=11 // pred_region
          _
        $region24: #{tpu_custom_call.1} parent=11 // pred_fallthru
          _
        // Predicated region
        $region25: #{tpu_custom_call.1} parent=11 // pred_check
          %p463 = pneg %p194
        $region26: #{tpu_custom_call.1} parent=11 // pred_check_branch
          %465 = sbr.rel (%p463) target = $region28
        $region27: #{tpu_custom_call.1} parent=11 // pred_region
          _
        $region28: #{tpu_custom_call.1} parent=11 // pred_fallthru
          _
        // Predicated region
        $region29: #{tpu_custom_call.1} parent=11 // pred_check
          %p466 = pneg %p215
        $region30: #{tpu_custom_call.1} parent=11 // pred_check_branch
          %468 = sbr.rel (%p466) target = $region32
        $region31: #{tpu_custom_call.1} parent=11 // pred_region
          _
        $region32: #{tpu_custom_call.1} parent=11 // pred_fallthru
          _
        // Predicated region
        $region33: #{tpu_custom_call.1} parent=11 // pred_check
          %p469 = pneg %p236
        $region34: #{tpu_custom_call.1} parent=11 // pred_check_branch
          %471 = sbr.rel (%p469) target = $region36
        $region35: #{tpu_custom_call.1} parent=11 // pred_region
          %473 = vsyncadd [#allocation6], 0
          %s474 = sshll.u32 %s8, 4
          %s475 = int_to_ptr.hbm [resolvable:$true] %s474
          %s476 = sshll.u32 [#allocation7], 4
          %s477 = int_to_ptr.vmem [resolvable:$true] %s476
          %482 = dma.hbm_to_vmem [thread:$0]  %s475, 4096, %s477, [#allocation6], 256, 256, 16
        $region36: #{tpu_custom_call.1} parent=11 // pred_fallthru
          _
        // Predicated region
        $region37: #{tpu_custom_call.1} parent=11 // pred_check
          %p483 = pneg %p257
        $region38: #{tpu_custom_call.1} parent=11 // pred_check_branch
          %485 = sbr.rel (%p483) target = $region40
        $region39: #{tpu_custom_call.1} parent=11 // pred_region
          _
        $region40: #{tpu_custom_call.1} parent=11 // pred_fallthru
          _
        // Predicated region
        $region41: #{tpu_custom_call.1} parent=11 // pred_check
          %p486 = pneg %p278
        $region42: #{tpu_custom_call.1} parent=11 // pred_check_branch
          %488 = sbr.rel (%p486) target = $region44
        $region43: #{tpu_custom_call.1} parent=11 // pred_region
          %490 = vsyncadd [#allocation9], 0
          %s491 = sshll.u32 %s10, 4
          %s492 = int_to_ptr.hbm [resolvable:$true] %s491
          %s493 = sshll.u32 [#allocation8], 4
          %s494 = int_to_ptr.vmem [resolvable:$true] %s493
          %499 = dma.hbm_to_vmem [thread:$0]  %s492, 256, %s494, [#allocation9], 128, 128, 8
        $region44: #{tpu_custom_call.1} parent=11 // pred_fallthru
          _
        // Predicated region
        $region45: #{tpu_custom_call.1} parent=11 // pred_check
          %p500 = pneg %p299
        $region46: #{tpu_custom_call.1} parent=11 // pred_check_branch
          %502 = sbr.rel (%p500) target = $region48
        $region47: #{tpu_custom_call.1} parent=11 // pred_region
          %504 = vsyncadd [#allocation9], 0
          %s505 = sshll.u32 %s11, 4
          %s506 = int_to_ptr.hbm [resolvable:$true] %s505
          %s507 = sshll.u32 [#allocation10], 4
          %s508 = int_to_ptr.vmem [resolvable:$true] %s507
          %513 = dma.hbm_to_vmem [thread:$0]  %s506, 2048, %s508, [#allocation9], 128, 128, 8
        $region48: #{tpu_custom_call.1} parent=11 // pred_fallthru
          _
        // Predicated region
        $region49: #{tpu_custom_call.1} parent=11 // pred_check
          %p514 = pneg %p320
        $region50: #{tpu_custom_call.1} parent=11 // pred_check_branch
          %516 = sbr.rel (%p514) target = $region52
        $region51: #{tpu_custom_call.1} parent=11 // pred_region
          _
        $region52: #{tpu_custom_call.1} parent=11 // pred_fallthru
          _
        // Predicated region
        $region53: #{tpu_custom_call.1} parent=11 // pred_check
          %p517 = pneg %p341
        $region54: #{tpu_custom_call.1} parent=11 // pred_check_branch
          %519 = sbr.rel (%p517) target = $region56
        $region55: #{tpu_custom_call.1} parent=11 // pred_region
          %521 = vsyncadd [#allocation12], 0
          %s522 = sshll.u32 %s13, 4
          %s523 = int_to_ptr.hbm [resolvable:$true] %s522
          %s524 = sshll.u32 [#allocation11], 4
          %s525 = int_to_ptr.vmem [resolvable:$true] %s524
          %530 = dma.hbm_to_vmem [thread:$0]  %s523, 2048, %s525, [#allocation12], 128, 128, 8
        $region56: #{tpu_custom_call.1} parent=11 // pred_fallthru
          _
        // Predicated region
        $region57: #{tpu_custom_call.1} parent=11 // pred_check
          %p531 = pneg %p362
        $region58: #{tpu_custom_call.1} parent=11 // pred_check_branch
          %533 = sbr.rel (%p531) target = $region60
        $region59: #{tpu_custom_call.1} parent=11 // pred_region
          _
        $region60: #{tpu_custom_call.1} parent=11 // pred_fallthru
          _
        // Predicated region
        $region61: #{tpu_custom_call.1} parent=11 // pred_check
          %p534 = pneg %p383
        $region62: #{tpu_custom_call.1} parent=11 // pred_check_branch
          %536 = sbr.rel (%p534) target = $region64
        $region63: #{tpu_custom_call.1} parent=11 // pred_region
          %538 = vsyncadd [#allocation12], 0
          %s539 = sshll.u32 %s15, 4
          %s540 = int_to_ptr.hbm [resolvable:$true] %s539
          %s541 = sshll.u32 [#allocation13], 4
          %s542 = int_to_ptr.vmem [resolvable:$true] %s541
          %547 = dma.hbm_to_vmem [thread:$0]  %s540, 2048, %s542, [#allocation12], 128, 128, 8
        $region64: #{tpu_custom_call.1} parent=11 // pred_fallthru
          _
        // Predicated region
        $region65: #{tpu_custom_call.1} parent=11 // pred_check
          %p548 = pneg %p404
        $region66: #{tpu_custom_call.1} parent=11 // pred_check_branch
          %550 = sbr.rel (%p548) target = $region68
        $region67: #{tpu_custom_call.1} parent=11 // pred_region
          _
        $region68: #{tpu_custom_call.1} parent=11 // pred_fallthru
          _
      $region12: #{tpu_custom_call.1} parent=5 // pred_fallthru
        _
      %p551 = scmp.lt.s32.totalorder %s32, 4
      // Predicated region
      $region69: #{tpu_custom_call.1} parent=5 // pred_check
        %p552 = pneg %p551
      $region70: #{tpu_custom_call.1} parent=5 // pred_check_branch
        %554 = sbr.rel (%p552) target = $region72
      $region71: #{tpu_custom_call.1} parent=5 // pred_region
        // Predicated region
        $region73: #{tpu_custom_call.1} parent=71 // pred_check
          %p555 = pneg %p52
        $region74: #{tpu_custom_call.1} parent=71 // pred_check_branch
          %557 = sbr.rel (%p555) target = $region76
        $region75: #{tpu_custom_call.1} parent=71 // pred_region
          %s558 = smul.u32 2, %s32
          %p559 = scmp.lt.s32.totalorder %s558, 7
          %s560 = scalar_select %p559, %s558, 7
          %s561 = smul.addr %s560, 8
          %s562 = scalar_lea.vmem %s0, %s561
          %s563 = smul.u32 2, %s32
        $region76: #{tpu_custom_call.1} parent=71 // pred_fallthru
          _
        // Predicated region
        $region77: #{tpu_custom_call.1} parent=71 // pred_check
          %p564 = pneg %p78
        $region78: #{tpu_custom_call.1} parent=71 // pred_check_branch
          %566 = sbr.rel (%p564) target = $region80
        $region79: #{tpu_custom_call.1} parent=71 // pred_region
          %s567 = smul.u32 2, %s32
          %p568 = scmp.lt.s32.totalorder %s567, 7
          %s569 = scalar_select %p568, %s567, 7
          %s570 = smul.addr %s569, 8
          %s571 = scalar_lea.vmem %s1, %s570
          %s572 = smul.u32 2, %s32
        $region80: #{tpu_custom_call.1} parent=71 // pred_fallthru
          _
        // Predicated region
        $region81: #{tpu_custom_call.1} parent=71 // pred_check
          %p573 = pneg %p104
        $region82: #{tpu_custom_call.1} parent=71 // pred_check_branch
          %575 = sbr.rel (%p573) target = $region84
        $region83: #{tpu_custom_call.1} parent=71 // pred_region
          %s576 = sand.u32 %s94, 1
          %s577 = scalar_lea.sflag [#allocation3], %s576
          %s578 = sand.u32 %s94, 1
          %s579 = smul.addr %s578, 16
          %s580 = scalar_lea.vmem [#allocation2], %s579
          %s581 = smul.u32 2, %s32
          %583 = vsyncadd %s577, 0
          %s584 = smul.addr %s581, 8
          %s585 = scalar_lea.hbm %s2, %s584
          %s586 = sshll.u32 %s585, 4
          %s587 = int_to_ptr.hbm [resolvable:$true] %s586
          %s588 = sshll.u32 %s580, 4
          %s589 = int_to_ptr.vmem [resolvable:$true] %s588
          %594 = dma.hbm_to_vmem [thread:$0]  %s587, 256, %s589, %s577, 128, 128, 8
        $region84: #{tpu_custom_call.1} parent=71 // pred_fallthru
          _
      $region72: #{tpu_custom_call.1} parent=5 // pred_fallthru
        _
      %p595 = scmp.le.s32.totalorder 1, %s32
      %p596 = scmp.lt.s32.totalorder %s32, 5
      %p597 = pnand %p595, %p596
      %p598 = pneg %p597
      // Predicated region
      $region85: #{tpu_custom_call.1} parent=5 // pred_check
        _
      $region86: #{tpu_custom_call.1} parent=5 // pred_check_branch
        %600 = sbr.rel (%p597) target = $region88
      $region87: #{tpu_custom_call.1} parent=5 // pred_region
        %s601 = ssub.s32 %s32, 1
        %s602 = sand.u32 %s97, 1
        %s603 = scalar_lea.sflag [#allocation3], %s602
        %s604 = sand.u32 %s97, 1
        %s605 = smul.addr %s604, 16
        %s606 = scalar_lea.vmem [#allocation2], %s605
        // Predicated region
        $region89: #{tpu_custom_call.1} parent=87 // pred_check
          %p607 = pneg %p110
        $region90: #{tpu_custom_call.1} parent=87 // pred_check_branch
          %609 = sbr.rel (%p607) target = $region92
        $region91: #{tpu_custom_call.1} parent=87 // pred_region
          %611 = dma.done %s603, 256
        $region92: #{tpu_custom_call.1} parent=87 // pred_fallthru
          _
        // Predicated region
        $region93: #{tpu_custom_call.1} parent=87 // pred_check
          %p612 = pneg %p152
        $region94: #{tpu_custom_call.1} parent=87 // pred_check_branch
          %614 = sbr.rel (%p612) target = $region96
        $region95: #{tpu_custom_call.1} parent=87 // pred_region
          %616 = dma.done [#allocation6], 128
        $region96: #{tpu_custom_call.1} parent=87 // pred_fallthru
          _
        // Predicated region
        $region97: #{tpu_custom_call.1} parent=87 // pred_check
          %p617 = pneg %p236
        $region98: #{tpu_custom_call.1} parent=87 // pred_check_branch
          %619 = sbr.rel (%p617) target = $region100
        $region99: #{tpu_custom_call.1} parent=87 // pred_region
          %621 = dma.done [#allocation6], 4096
        $region100: #{tpu_custom_call.1} parent=87 // pred_fallthru
          _
        // Predicated region
        $region101: #{tpu_custom_call.1} parent=87 // pred_check
          %p622 = pneg %p278
        $region102: #{tpu_custom_call.1} parent=87 // pred_check_branch
          %624 = sbr.rel (%p622) target = $region104
        $region103: #{tpu_custom_call.1} parent=87 // pred_region
          %626 = dma.done [#allocation9], 256
        $region104: #{tpu_custom_call.1} parent=87 // pred_fallthru
          _
        // Predicated region
        $region105: #{tpu_custom_call.1} parent=87 // pred_check
          %p627 = pneg %p299
        $region106: #{tpu_custom_call.1} parent=87 // pred_check_branch
          %629 = sbr.rel (%p627) target = $region108
        $region107: #{tpu_custom_call.1} parent=87 // pred_region
          %631 = dma.done [#allocation9], 2048
        $region108: #{tpu_custom_call.1} parent=87 // pred_fallthru
          _
        // Predicated region
        $region109: #{tpu_custom_call.1} parent=87 // pred_check
          %p632 = pneg %p341
        $region110: #{tpu_custom_call.1} parent=87 // pred_check_branch
          %634 = sbr.rel (%p632) target = $region112
        $region111: #{tpu_custom_call.1} parent=87 // pred_region
          %636 = dma.done [#allocation12], 2048
        $region112: #{tpu_custom_call.1} parent=87 // pred_fallthru
          _
        // Predicated region
        $region113: #{tpu_custom_call.1} parent=87 // pred_check
          %p637 = pneg %p383
        $region114: #{tpu_custom_call.1} parent=87 // pred_check_branch
          %639 = sbr.rel (%p637) target = $region116
        $region115: #{tpu_custom_call.1} parent=87 // pred_region
          %641 = dma.done [#allocation12], 2048
        $region116: #{tpu_custom_call.1} parent=87 // pred_fallthru
          _
        %s642 = smul.u32 2, %s37
        %p643 = scmp.lt.s32.totalorder %s642, 7
        %s644 = scalar_select %p643, %s642, 7
        %s645 = smul.addr %s644, 8
        %s646 = scalar_lea.vmem %s0, %s645
        %p647 = pneg %p58
        %p648 = pneg %p55
        %s649 = smul.u32 2, %s37
        %p650 = scmp.lt.s32.totalorder %s649, 7
        %s651 = scalar_select %p650, %s649, 7
        %s652 = smul.addr %s651, 8
        %s653 = scalar_lea.vmem %s1, %s652
        %p654 = pneg %p84
        %p655 = pneg %p81
        %s656 = sand.u32 %s97, 1
        %s657 = scalar_lea.sflag [#allocation3], %s656
        %s658 = sand.u32 %s97, 1
        %s659 = smul.addr %s658, 16
        %s660 = scalar_lea.vmem [#allocation2], %s659
        %p661 = pneg %p110
        %p662 = pneg %p107
        %p663 = pneg %p131
        %p664 = pneg %p128
        %p665 = pneg %p152
        %p666 = pneg %p149
        %p667 = pneg %p173
        %p668 = pneg %p170
        %p669 = pneg %p194
        %p670 = pneg %p191
        %p671 = pneg %p215
        %p672 = pneg %p212
        %p673 = pneg %p236
        %p674 = pneg %p233
        %p675 = pneg %p257
        %p676 = pneg %p254
        %p677 = pneg %p278
        %p678 = pneg %p275
        %p679 = pneg %p299
        %p680 = pneg %p296
        %p681 = pneg %p320
        %p682 = pneg %p317
        %p683 = pneg %p341
        %p684 = pneg %p338
        %p685 = pneg %p362
        %p686 = pneg %p359
        %p687 = pneg %p383
        %p688 = pneg %p380
        %p689 = pneg %p404
        %p690 = pneg %p401
        %p691 = pneg %p430
        %p692 = pneg %p427
        %s693 = sand.u32 %s417, 1
        %s694 = scalar_lea.sflag [#allocation4], %s693
        %s695 = sand.u32 %s417, 1
        %s696 = smul.addr %s695, 48
        %s697 = scalar_lea.vmem [#allocation14], %s696
        %s698 = smul.u32 2, %s37
        %p699 = scmp.lt.s32.totalorder %s698, 7
        %s700 = scalar_select %p699, %s698, 7
        %s701 = smul.addr %s700, 8
        %s702 = scalar_lea.vmem %s0, %s701
        %s703 = smul.u32 2, %s37
        %s704 = smul.u32 2, %s37
        %p705 = scmp.lt.s32.totalorder %s704, 7
        %s706 = scalar_select %p705, %s704, 7
        %s707 = smul.addr %s706, 8
        %s708 = scalar_lea.vmem %s1, %s707
        %s709 = smul.u32 2, %s37
        %s710 = smul.u32 2, %s37
        %s711 = smul.u32 2, %s37
        %v712 = vld [vmem:[%s702] sm:$0xff]
        %v713 = vld [vmem:[%s702 + $0x8] sm:$0xff]
        %v714 = vld [vmem:[%s708] sm:$0xff]
        %v715 = vld [vmem:[%s708 + $0x8] sm:$0xff]
        %v716 = vld [vmem:[%s606] sm:$0xff]
        %v717 = vld [vmem:[%s606 + $0x8] sm:$0xff]
        %v718 = vld [vmem:[%s3] sm:$0xff]
        %v719 = vld [vmem:[%s3 + $0x8] sm:$0xff]
        %v720 = vld [vmem:[#allocation5] sm:$0xff]
        %vm721 = vcmask 64512
        %v723 = vsel %vm721, %v714, 0
        %v726 = vsel %vm721, %v715, 0
        %728 = vmatpush.msra.mxu0 0.0
        %729 = vmatpush.msra.mxu0 0.0
        %730 = vmatpush.msra.mxu0 0.0
        %731 = vmatpush.msra.mxu0 0.0
        %732 = vmatpush.msra.mxu0 0.0
        %733 = vmatpush.msra.mxu0 0.0
        %734 = vmatpush.msra.mxu0 0.0
        %735 = vmatpush.msra.mxu0 0.0
        %736 = vmatpush.msra.mxu0 0.0
        %737 = vmatpush.msra.mxu0 0.0
        %738 = vmatpush.msra.mxu0 0.0
        %739 = vmatpush.msra.mxu0 0.0
        %740 = vmatpush.msra.mxu0 0.0
        %741 = vmatpush.msra.mxu0 0.0
        %742 = vmatpush.msra.mxu0 0.0
        %743 = vmatpush.msra.mxu0 %v720
        %744 = vmatmul.f32.gmra.mxu0 %v723
        %v745 = vpop.f32.mrf.mxu0
        %v746 = vadd.f32 0.0, %v745
        %747 = vmatmul.f32.gmra.mxu0 %v726
        %v748 = vpop.f32.mrf.mxu0
        %v749 = vadd.f32 0.0, %v748
        %750 = vdwg.mxu0
        %vm751 = vcmask 130048
        %v753 = vsel %vm751, %v712, 0
        %v756 = vsel %vm751, %v713, 0
        %758 = vmatpush.msra.mxu0 0.0
        %759 = vmatpush.msra.mxu0 0.0
        %760 = vmatpush.msra.mxu0 0.0
        %761 = vmatpush.msra.mxu0 0.0
        %762 = vmatpush.msra.mxu0 0.0
        %763 = vmatpush.msra.mxu0 0.0
        %764 = vmatpush.msra.mxu0 0.0
        %765 = vmatpush.msra.mxu0 0.0
        %766 = vmatpush.msra.mxu0 0.0
        %767 = vmatpush.msra.mxu0 0.0
        %768 = vmatpush.msra.mxu0 0.0
        %769 = vmatpush.msra.mxu0 0.0
        %770 = vmatpush.msra.mxu0 0.0
        %771 = vmatpush.msra.mxu0 0.0
        %772 = vmatpush.msra.mxu0 %v719
        %773 = vmatpush.msra.mxu0 %v718
        %774 = vmatmul.f32.gmra.mxu0 %v753
        %v775 = vpop.f32.mrf.mxu0
        %v776 = vadd.f32 %v746, %v775
        %777 = vmatmul.f32.gmra.mxu0 %v756
        %v778 = vpop.f32.mrf.mxu0
        %v779 = vadd.f32 %v749, %v778
        %780 = vdwg.mxu0
        %v781 = vld [vmem:[%s5] sm:$0x1]
        %v783 = vperm.slane %v781, 0
        %v785 = vadd.f32 %v776, %v783
        %v786 = vadd.f32 %v779, %v783
        %v787 = vmax.f32 %v785, 0.0
        %v788 = vmax.f32 %v786, 0.0
        %v789 = vld [vmem:[%s6] sm:$0xff]
        %v790 = vld [vmem:[%s6 + $0x8] sm:$0xff]
        %v791 = vld [vmem:[%s6 + $0x10] sm:$0xff]
        %v792 = vld [vmem:[%s6 + $0x18] sm:$0xff]
        %v793 = vld [vmem:[%s6 + $0x20] sm:$0xff]
        %v794 = vld [vmem:[%s6 + $0x28] sm:$0xff]
        %v795 = vld [vmem:[%s6 + $0x30] sm:$0xff]
        %v796 = vld [vmem:[%s6 + $0x38] sm:$0xff]
        %v797 = vld [vmem:[%s6 + $0x40] sm:$0xff]
        %v798 = vld [vmem:[%s6 + $0x48] sm:$0xff]
        %v799 = vld [vmem:[%s6 + $0x50] sm:$0xff]
        %v800 = vld [vmem:[%s6 + $0x58] sm:$0xff]
        %v801 = vld [vmem:[%s6 + $0x60] sm:$0xff]
        %v802 = vld [vmem:[%s6 + $0x68] sm:$0xff]
        %v803 = vld [vmem:[%s6 + $0x70] sm:$0xff]
        %v804 = vld [vmem:[%s6 + $0x78] sm:$0xff]
        %v805 = vld [vmem:[%s7] sm:$0x1]
        %v807 = vperm.slane %v805, 0
        %809 = vmatpush.msra.mxu0 %v804
        %810 = vmatpush.msra.mxu0 %v803
        %811 = vmatpush.msra.mxu0 %v802
        %812 = vmatpush.msra.mxu0 %v801
        %813 = vmatpush.msra.mxu0 %v800
        %814 = vmatpush.msra.mxu0 %v799
        %815 = vmatpush.msra.mxu0 %v798
        %816 = vmatpush.msra.mxu0 %v797
        %817 = vmatpush.msra.mxu0 %v796
        %818 = vmatpush.msra.mxu0 %v795
        %819 = vmatpush.msra.mxu0 %v794
        %820 = vmatpush.msra.mxu0 %v793
        %821 = vmatpush.msra.mxu0 %v792
        %822 = vmatpush.msra.mxu0 %v791
        %823 = vmatpush.msra.mxu0 %v790
        %824 = vmatpush.msra.mxu0 %v789
        %825 = vmatmul.f32.gmra.mxu0 %v787
        %v826 = vpop.f32.mrf.mxu0
        %v827 = vadd.f32 %v807, %v826
        %828 = vmatmul.f32.gmra.mxu0 %v788
        %v829 = vpop.f32.mrf.mxu0
        %v830 = vadd.f32 %v807, %v829
        %831 = vdwg.mxu0
        %v832 = vmax.f32 %v827, 0.0
        %v833 = vmax.f32 %v830, 0.0
        %v834 = vld [vmem:[#allocation7] sm:$0xff]
        %v835 = vld [vmem:[#allocation7 + $0x8] sm:$0xff]
        %v836 = vld [vmem:[#allocation7 + $0x10] sm:$0xff]
        %v837 = vld [vmem:[#allocation7 + $0x18] sm:$0xff]
        %v838 = vld [vmem:[#allocation7 + $0x20] sm:$0xff]
        %v839 = vld [vmem:[#allocation7 + $0x28] sm:$0xff]
        %v840 = vld [vmem:[#allocation7 + $0x30] sm:$0xff]
        %v841 = vld [vmem:[#allocation7 + $0x38] sm:$0xff]
        %v842 = vld [vmem:[#allocation7 + $0x40] sm:$0xff]
        %v843 = vld [vmem:[#allocation7 + $0x48] sm:$0xff]
        %v844 = vld [vmem:[#allocation7 + $0x50] sm:$0xff]
        %v845 = vld [vmem:[#allocation7 + $0x58] sm:$0xff]
        %v846 = vld [vmem:[#allocation7 + $0x60] sm:$0xff]
        %v847 = vld [vmem:[#allocation7 + $0x68] sm:$0xff]
        %v848 = vld [vmem:[#allocation7 + $0x70] sm:$0xff]
        %v849 = vld [vmem:[#allocation7 + $0x78] sm:$0xff]
        %v850 = vld [vmem:[#allocation7 + $0x80] sm:$0xff]
        %v851 = vld [vmem:[#allocation7 + $0x88] sm:$0xff]
        %v852 = vld [vmem:[#allocation7 + $0x90] sm:$0xff]
        %v853 = vld [vmem:[#allocation7 + $0x98] sm:$0xff]
        %v854 = vld [vmem:[#allocation7 + $0xa0] sm:$0xff]
        %v855 = vld [vmem:[#allocation7 + $0xa8] sm:$0xff]
        %v856 = vld [vmem:[#allocation7 + $0xb0] sm:$0xff]
        %v857 = vld [vmem:[#allocation7 + $0xb8] sm:$0xff]
        %v858 = vld [vmem:[#allocation7 + $0xc0] sm:$0xff]
        %v859 = vld [vmem:[#allocation7 + $0xc8] sm:$0xff]
        %v860 = vld [vmem:[#allocation7 + $0xd0] sm:$0xff]
        %v861 = vld [vmem:[#allocation7 + $0xd8] sm:$0xff]
        %v862 = vld [vmem:[#allocation7 + $0xe0] sm:$0xff]
        %v863 = vld [vmem:[#allocation7 + $0xe8] sm:$0xff]
        %v864 = vld [vmem:[#allocation7 + $0xf0] sm:$0xff]
        %v865 = vld [vmem:[#allocation7 + $0xf8] sm:$0xff]
        %v866 = vld [vmem:[%s9] sm:$0x3]
        %v868 = vperm.slane %v866, 0
        %v869 = vperm.slane %v866, 1
        %872 = vmatpush.msra.mxu0 %v864
        %873 = vmatpush.msra.mxu0 %v862
        %874 = vmatpush.msra.mxu0 %v860
        %875 = vmatpush.msra.mxu0 %v858
        %876 = vmatpush.msra.mxu0 %v856
        %877 = vmatpush.msra.mxu0 %v854
        %878 = vmatpush.msra.mxu0 %v852
        %879 = vmatpush.msra.mxu0 %v850
        %880 = vmatpush.msra.mxu0 %v848
        %881 = vmatpush.msra.mxu0 %v846
        %882 = vmatpush.msra.mxu0 %v844
        %883 = vmatpush.msra.mxu0 %v842
        %884 = vmatpush.msra.mxu0 %v840
        %885 = vmatpush.msra.mxu0 %v838
        %886 = vmatpush.msra.mxu0 %v836
        %887 = vmatpush.msra.mxu0 %v834
        %888 = vmatmul.f32.gmra.mxu0 %v832
        %v889 = vpop.f32.mrf.mxu0
        %v890 = vadd.f32 %v868, %v889
        %891 = vmatmul.f32.gmra.mxu0 %v833
        %v892 = vpop.f32.mrf.mxu0
        %v893 = vadd.f32 %v868, %v892
        %894 = vdwg.mxu0
        %895 = vmatpush.msra.mxu0 %v865
        %896 = vmatpush.msra.mxu0 %v863
        %897 = vmatpush.msra.mxu0 %v861
        %898 = vmatpush.msra.mxu0 %v859
        %899 = vmatpush.msra.mxu0 %v857
        %900 = vmatpush.msra.mxu0 %v855
        %901 = vmatpush.msra.mxu0 %v853
        %902 = vmatpush.msra.mxu0 %v851
        %903 = vmatpush.msra.mxu0 %v849
        %904 = vmatpush.msra.mxu0 %v847
        %905 = vmatpush.msra.mxu0 %v845
        %906 = vmatpush.msra.mxu0 %v843
        %907 = vmatpush.msra.mxu0 %v841
        %908 = vmatpush.msra.mxu0 %v839
        %909 = vmatpush.msra.mxu0 %v837
        %910 = vmatpush.msra.mxu0 %v835
        %911 = vmatmul.f32.gmra.mxu0 %v832
        %v912 = vpop.f32.mrf.mxu0
        %v913 = vadd.f32 %v869, %v912
        %914 = vmatmul.f32.gmra.mxu0 %v833
        %v915 = vpop.f32.mrf.mxu0
        %v916 = vadd.f32 %v869, %v915
        %917 = vdwg.mxu0
        %v918 = vmax.f32 %v913, -4.0
        %v919 = vmax.f32 %v916, -4.0
        %v920 = vmin.f32 %v918, 15.0
        %v921 = vmin.f32 %v919, 15.0
        %v922 = vmul.f32 %v920, 1.442695
        %v923 = vpow.pop %v922
        %v924 = vmul.f32 %v921, 1.442695
        %v925 = vpow.pop %v924
        %v926 = vmul.f32 %v923, %v716
        %v927 = vmul.f32 %v925, %v717
        %v928 = vadd.f32 %v890, %v926
        %v929 = vadd.f32 %v893, %v927
        %v930 = vld [vmem:[#allocation8] sm:$0xff]
        %v931 = vld [vmem:[#allocation8 + $0x8] sm:$0xff]
        %v932 = vld [vmem:[#allocation10] sm:$0xff]
        %v933 = vld [vmem:[#allocation10 + $0x8] sm:$0xff]
        %v934 = vld [vmem:[#allocation10 + $0x10] sm:$0xff]
        %v935 = vld [vmem:[#allocation10 + $0x18] sm:$0xff]
        %v936 = vld [vmem:[#allocation10 + $0x20] sm:$0xff]
        %v937 = vld [vmem:[#allocation10 + $0x28] sm:$0xff]
        %v938 = vld [vmem:[#allocation10 + $0x30] sm:$0xff]
        %v939 = vld [vmem:[#allocation10 + $0x38] sm:$0xff]
        %v940 = vld [vmem:[#allocation10 + $0x40] sm:$0xff]
        %v941 = vld [vmem:[#allocation10 + $0x48] sm:$0xff]
        %v942 = vld [vmem:[#allocation10 + $0x50] sm:$0xff]
        %v943 = vld [vmem:[#allocation10 + $0x58] sm:$0xff]
        %v944 = vld [vmem:[#allocation10 + $0x60] sm:$0xff]
        %v945 = vld [vmem:[#allocation10 + $0x68] sm:$0xff]
        %v946 = vld [vmem:[#allocation10 + $0x70] sm:$0xff]
        %v947 = vld [vmem:[#allocation10 + $0x78] sm:$0xff]
        %948 = vmatpush.msra.mxu0 %v947
        %949 = vmatpush.msra.mxu0 %v946
        %950 = vmatpush.msra.mxu0 %v945
        %951 = vmatpush.msra.mxu0 %v944
        %952 = vmatpush.msra.mxu0 %v943
        %953 = vmatpush.msra.mxu0 %v942
        %954 = vmatpush.msra.mxu0 %v941
        %955 = vmatpush.msra.mxu0 %v940
        %956 = vmatpush.msra.mxu0 %v939
        %957 = vmatpush.msra.mxu0 %v938
        %958 = vmatpush.msra.mxu0 %v937
        %959 = vmatpush.msra.mxu0 %v936
        %960 = vmatpush.msra.mxu0 %v935
        %961 = vmatpush.msra.mxu0 %v934
        %962 = vmatpush.msra.mxu0 %v933
        %963 = vmatpush.msra.mxu0 %v932
        %964 = vmatmul.f32.gmra.mxu0 %v928
        %v965 = vpop.f32.mrf.mxu0
        %v966 = vadd.f32 0.0, %v965
        %967 = vmatmul.f32.gmra.mxu0 %v929
        %v968 = vpop.f32.mrf.mxu0
        %v969 = vadd.f32 0.0, %v968
        %970 = vdwg.mxu0
        %971 = vmatpush.msra.mxu0 0.0
        %972 = vmatpush.msra.mxu0 0.0
        %973 = vmatpush.msra.mxu0 0.0
        %974 = vmatpush.msra.mxu0 0.0
        %975 = vmatpush.msra.mxu0 0.0
        %976 = vmatpush.msra.mxu0 0.0
        %977 = vmatpush.msra.mxu0 0.0
        %978 = vmatpush.msra.mxu0 0.0
        %979 = vmatpush.msra.mxu0 0.0
        %980 = vmatpush.msra.mxu0 0.0
        %981 = vmatpush.msra.mxu0 0.0
        %982 = vmatpush.msra.mxu0 0.0
        %983 = vmatpush.msra.mxu0 0.0
        %984 = vmatpush.msra.mxu0 0.0
        %985 = vmatpush.msra.mxu0 %v931
        %986 = vmatpush.msra.mxu0 %v930
        %987 = vmatmul.f32.gmra.mxu0 %v753
        %v988 = vpop.f32.mrf.mxu0
        %v989 = vadd.f32 %v966, %v988
        %990 = vmatmul.f32.gmra.mxu0 %v756
        %v991 = vpop.f32.mrf.mxu0
        %v992 = vadd.f32 %v969, %v991
        %993 = vdwg.mxu0
        %v994 = vld [vmem:[%s12] sm:$0x1]
        %v996 = vperm.slane %v994, 0
        %v998 = vadd.f32 %v989, %v996
        %v999 = vadd.f32 %v992, %v996
        %v1000 = vmax.f32 %v998, 0.0
        %v1001 = vmax.f32 %v999, 0.0
        %v1002 = vld [vmem:[#allocation11] sm:$0xff]
        %v1003 = vld [vmem:[#allocation11 + $0x8] sm:$0xff]
        %v1004 = vld [vmem:[#allocation11 + $0x10] sm:$0xff]
        %v1005 = vld [vmem:[#allocation11 + $0x18] sm:$0xff]
        %v1006 = vld [vmem:[#allocation11 + $0x20] sm:$0xff]
        %v1007 = vld [vmem:[#allocation11 + $0x28] sm:$0xff]
        %v1008 = vld [vmem:[#allocation11 + $0x30] sm:$0xff]
        %v1009 = vld [vmem:[#allocation11 + $0x38] sm:$0xff]
        %v1010 = vld [vmem:[#allocation11 + $0x40] sm:$0xff]
        %v1011 = vld [vmem:[#allocation11 + $0x48] sm:$0xff]
        %v1012 = vld [vmem:[#allocation11 + $0x50] sm:$0xff]
        %v1013 = vld [vmem:[#allocation11 + $0x58] sm:$0xff]
        %v1014 = vld [vmem:[#allocation11 + $0x60] sm:$0xff]
        %v1015 = vld [vmem:[#allocation11 + $0x68] sm:$0xff]
        %v1016 = vld [vmem:[#allocation11 + $0x70] sm:$0xff]
        %v1017 = vld [vmem:[#allocation11 + $0x78] sm:$0xff]
        %v1018 = vld [vmem:[%s14] sm:$0x1]
        %v1020 = vperm.slane %v1018, 0
        %1022 = vmatpush.msra.mxu0 %v1017
        %1023 = vmatpush.msra.mxu0 %v1016
        %1024 = vmatpush.msra.mxu0 %v1015
        %1025 = vmatpush.msra.mxu0 %v1014
        %1026 = vmatpush.msra.mxu0 %v1013
        %1027 = vmatpush.msra.mxu0 %v1012
        %1028 = vmatpush.msra.mxu0 %v1011
        %1029 = vmatpush.msra.mxu0 %v1010
        %1030 = vmatpush.msra.mxu0 %v1009
        %1031 = vmatpush.msra.mxu0 %v1008
        %1032 = vmatpush.msra.mxu0 %v1007
        %1033 = vmatpush.msra.mxu0 %v1006
        %1034 = vmatpush.msra.mxu0 %v1005
        %1035 = vmatpush.msra.mxu0 %v1004
        %1036 = vmatpush.msra.mxu0 %v1003
        %1037 = vmatpush.msra.mxu0 %v1002
        %1038 = vmatmul.f32.gmra.mxu0 %v1000
        %v1039 = vpop.f32.mrf.mxu0
        %v1040 = vadd.f32 %v1020, %v1039
        %1041 = vmatmul.f32.gmra.mxu0 %v1001
        %v1042 = vpop.f32.mrf.mxu0
        %v1043 = vadd.f32 %v1020, %v1042
        %1044 = vdwg.mxu0
        %v1045 = vmax.f32 %v1040, 0.0
        %v1046 = vmax.f32 %v1043, 0.0
        %v1047 = vld [vmem:[#allocation13] sm:$0xff]
        %v1048 = vld [vmem:[#allocation13 + $0x8] sm:$0xff]
        %v1049 = vld [vmem:[#allocation13 + $0x10] sm:$0xff]
        %v1050 = vld [vmem:[#allocation13 + $0x18] sm:$0xff]
        %v1051 = vld [vmem:[#allocation13 + $0x20] sm:$0xff]
        %v1052 = vld [vmem:[#allocation13 + $0x28] sm:$0xff]
        %v1053 = vld [vmem:[#allocation13 + $0x30] sm:$0xff]
        %v1054 = vld [vmem:[#allocation13 + $0x38] sm:$0xff]
        %v1055 = vld [vmem:[#allocation13 + $0x40] sm:$0xff]
        %v1056 = vld [vmem:[#allocation13 + $0x48] sm:$0xff]
        %v1057 = vld [vmem:[#allocation13 + $0x50] sm:$0xff]
        %v1058 = vld [vmem:[#allocation13 + $0x58] sm:$0xff]
        %v1059 = vld [vmem:[#allocation13 + $0x60] sm:$0xff]
        %v1060 = vld [vmem:[#allocation13 + $0x68] sm:$0xff]
        %v1061 = vld [vmem:[#allocation13 + $0x70] sm:$0xff]
        %v1062 = vld [vmem:[#allocation13 + $0x78] sm:$0xff]
        %v1063 = vld [vmem:[%s16] sm:$0x1]
        %v1065 = vperm.slane %v1063, 0
        %1067 = vmatpush.msra.mxu0 %v1062
        %1068 = vmatpush.msra.mxu0 %v1061
        %1069 = vmatpush.msra.mxu0 %v1060
        %1070 = vmatpush.msra.mxu0 %v1059
        %1071 = vmatpush.msra.mxu0 %v1058
        %1072 = vmatpush.msra.mxu0 %v1057
        %1073 = vmatpush.msra.mxu0 %v1056
        %1074 = vmatpush.msra.mxu0 %v1055
        %1075 = vmatpush.msra.mxu0 %v1054
        %1076 = vmatpush.msra.mxu0 %v1053
        %1077 = vmatpush.msra.mxu0 %v1052
        %1078 = vmatpush.msra.mxu0 %v1051
        %1079 = vmatpush.msra.mxu0 %v1050
        %1080 = vmatpush.msra.mxu0 %v1049
        %1081 = vmatpush.msra.mxu0 %v1048
        %1082 = vmatpush.msra.mxu0 %v1047
        %1083 = vmatmul.f32.gmra.mxu0 %v1045
        %v1084 = vpop.f32.mrf.mxu0
        %v1085 = vadd.f32 %v1065, %v1084
        %1086 = vmatmul.f32.gmra.mxu0 %v1046
        %v1087 = vpop.f32.mrf.mxu0
        %v1088 = vadd.f32 %v1065, %v1087
        %1089 = vdwg.mxu0
        %v1090 = vtanh.pop %v1085
        %v1091 = vtanh.pop %v1088
        %1092 = vst [vmem:[%s697] sm:$0xff] %v1090
        %1093 = vst [vmem:[%s697 + $0x18] sm:$0xff] %v1091
        %1094 = vst [vmem:[%s697 + $0x8] sm:$0xff] %v890
        %1095 = vst [vmem:[%s697 + $0x20] sm:$0xff] %v893
        %1096 = vst [vmem:[%s697 + $0x10] sm:$0xff] %v923
        %1097 = vst [vmem:[%s697 + $0x28] sm:$0xff] %v925
        %s1098 = sand.u32 %s417, 1
        %s1099 = scalar_lea.sflag [#allocation4], %s1098
        %s1100 = sand.u32 %s417, 1
        %s1101 = smul.addr %s1100, 48
        %s1102 = scalar_lea.vmem [#allocation14], %s1101
        // Predicated region
        $region117: #{tpu_custom_call.1} parent=87 // pred_check
          %p1103 = pneg %p427
        $region118: #{tpu_custom_call.1} parent=87 // pred_check_branch
          %1105 = sbr.rel (%p1103) target = $region120
        $region119: #{tpu_custom_call.1} parent=87 // pred_region
          %s1106 = smul.u32 2, %s37
          %1108 = vsyncadd %s1099, 0
          %s1109 = smul.addr %s1106, 3
          %s1110 = smul.addr %s1109, 8
          %s1111 = scalar_lea.hbm %s17, %s1110
          %s1112 = sshll.u32 %s1102, 4
          %s1113 = int_to_ptr.vmem [resolvable:$true] %s1112
          %s1114 = sshll.u32 %s1111, 4
          %s1115 = int_to_ptr.hbm [resolvable:$true] %s1114
          %1120 = dma.vmem_to_hbm [thread:$0]  %s1113, 768, %s1115, %s1099, 384, 384, 24
        $region120: #{tpu_custom_call.1} parent=87 // pred_fallthru
          _
      $region88: #{tpu_custom_call.1} parent=5 // pred_fallthru
        _
      %p1121 = scmp.le.s32.totalorder 2, %s32
      // Predicated region
      $region121: #{tpu_custom_call.1} parent=5 // pred_check
        %p1122 = pneg %p1121
      $region122: #{tpu_custom_call.1} parent=5 // pred_check_branch
        %1124 = sbr.rel (%p1122) target = $region124
      $region123: #{tpu_custom_call.1} parent=5 // pred_region
        %s1125 = ssub.s32 %s32, 2
        // Predicated region
        $region125: #{tpu_custom_call.1} parent=123 // pred_check
          %p1126 = pneg %p433
        $region126: #{tpu_custom_call.1} parent=123 // pred_check_branch
          %1128 = sbr.rel (%p1126) target = $region128
        $region127: #{tpu_custom_call.1} parent=123 // pred_region
          %s1129 = sand.u32 %s418, 1
          %s1130 = scalar_lea.sflag [#allocation4], %s1129
          %s1131 = sand.u32 %s418, 1
          %s1132 = smul.addr %s1131, 48
          %s1133 = scalar_lea.vmem [#allocation14], %s1132
          %1135 = dma.done %s1130, 768
        $region128: #{tpu_custom_call.1} parent=123 // pred_fallthru
          _
      $region124: #{tpu_custom_call.1} parent=5 // pred_fallthru
        _
    $region6: #{tpu_custom_call.1} parent=1 // loop_footer
      %s36 = sadd.s32 1, %s32
    $region7: #{tpu_custom_call.1} parent=1 // loop_footer_branch
      %31 = sbr.rel target = $region3
    $region8: #{tpu_custom_call.1} parent=1 // loop_exit
      _
    %1136 = vsyncpa [#allocation3], 1
    %s1137 = scalar_lea.sflag [#allocation3], 1
    %1138 = vsyncpa %s1137, 1
    %1139 = vsyncpa [#allocation6], 1
    %1140 = vsyncpa [#allocation9], 1
    %1141 = vsyncpa [#allocation12], 1
    %1142 = vsyncpa [#allocation4], 1
    %s1143 = scalar_lea.sflag [#allocation4], 1
    %1144 = vsyncpa %s1143, 1

</llo_original>
